<compile_context>
chip_gen: v5e
topology: v5e:2x2
jax: 0.10.0
libtpu: 0.0.40
codegen_flags: <defaults>
</compile_context>

<pallas_src>
import math

import jax
import jax.numpy as jnp
from jax import lax
from jax.experimental import pallas as pl
from jax.experimental.pallas import tpu as pltpu


def _attention_kernel(x1_ref, x2_ref, a_eca_ref, p_ref, eh_ref, ew_ref,
                      w1_ref, b1_ref, wh_ref, ww_ref, o_ref):
    # x1_ref, x2_ref, o_ref : (Bt, C, HW)  channel-major slabs (lanes = HW)
    # a_eca_ref             : (C, C)       banded matrix == ECA Conv1d
    # p_ref                 : (HW, H+W)    fused [row-mean | col-mean] pooling
    # eh_ref / ew_ref       : (H, HW) / (W, HW)  0/1 broadcast-back operators
    # w1_ref                : (Cr, C)      conv_1x1 weight, BN scale folded in
    # b1_ref                : (Cr, 1)      folded BN bias
    # wh_ref / ww_ref       : (C, Cr)      F_h / F_w 1x1-conv weights
    f32 = jnp.float32
    H = eh_ref.shape[0]
    bt = x1_ref.shape[0]

    for b in range(bt):                      # static unroll; Bt is small
        x1 = x1_ref[b].astype(f32)           # (C, HW)
        x2 = x2_ref[b].astype(f32)           # (C, HW)

        # ---- channel_att (ECA) -------------------------------------------
        # Pool first (XLU lane reduce), then the banded conv on the tiny
        # (C, 1) pooled vector.  Mathematically identical to conv-then-mean.
        pooled = jnp.mean(x1, axis=-1, keepdims=True)                  # (C, 1)
        attn = jax.nn.sigmoid(
            jnp.dot(a_eca_ref[...], pooled,
                    preferred_element_type=f32))                       # (C, 1)
        z = x1 * attn + x2                                             # (C, HW)

        # ---- local_att stage 1 (channel-reduce first, then pool) ---------
        u = jnp.dot(w1_ref[...], z, preferred_element_type=f32)        # (Cr, HW)
        t = jnp.dot(u, p_ref[...], preferred_element_type=f32)         # (Cr, H+W)
        t = jnp.maximum(t + b1_ref[...], 0.0)
        th = t[:, :H]                                                  # (Cr, H)
        tw = t[:, H:]                                                  # (Cr, W)

        # ---- local_att stage 2 (broadcast before the C-wide matmul) ------
        # Exact because e_h / e_w have exactly one 1 per column, so sigmoid
        # commutes through them.
        th_full = jnp.dot(th, eh_ref[...], preferred_element_type=f32)  # (Cr, HW)
        tw_full = jnp.dot(tw, ew_ref[...], preferred_element_type=f32)  # (Cr, HW)
        sh = jax.nn.sigmoid(
            jnp.dot(wh_ref[...], th_full, preferred_element_type=f32))  # (C, HW)
        sw = jax.nn.sigmoid(
            jnp.dot(ww_ref[...], tw_full, preferred_element_type=f32))  # (C, HW)

        o_ref[b] = (z * sh * sw).astype(o_ref.dtype)


def attention_model(x1, x2, w_eca, w1, bn_gamma, bn_beta, bn_mean, bn_var,
                    wh, ww, *, eps=1e-5, io_dtype=jnp.float32, batch_block=1):
    """Fused attention_model forward (eval-mode BatchNorm).

    x1, x2 : (B, C, H, W)  -- the two inputs of the module (x[0], x[1])
    w_eca  : (1, 1, k) or (k,)  ECA Conv1d weight (no bias)
    w1     : (Cr, C)  conv_1x1 weight;  bn_* : (Cr,) BatchNorm2d params/stats
    wh, ww : (C, Cr)  F_h / F_w 1x1-conv weights
    io_dtype : dtype of the x1/x2/out HBM slabs (use bf16 on v6e/v7x for
               large shapes; math is always accumulated in f32).
    batch_block : batch elements per grid step (amortizes per-step overhead).
    """
    assert x1.shape == x2.shape
    B, C, H, W = x1.shape
    Cr = w1.shape[0]
    HW = H * W
    f32 = jnp.float32

    # Contiguous reshape only (no transpose): channels -> sublanes, HW -> lanes.
    x1f = x1.reshape(B, C, HW).astype(io_dtype)
    x2f = x2.reshape(B, C, HW).astype(io_dtype)

    # ECA Conv1d (1->1 channel, zero pad, no bias) as a banded (C, C) matrix.
    we = w_eca.reshape(-1).astype(f32)
    k = we.shape[0]
    pad = (k - 1) // 2
    ci = jnp.arange(C)
    d = ci[None, :] - ci[:, None] + pad              # tap index per (c, c')
    a_eca = jnp.where((d >= 0) & (d < k), we[jnp.clip(d, 0, k - 1)], 0.0)
    a_eca = a_eca.astype(f32)                        # (C, C)

    # Pooling / broadcast operators over the flattened spatial axis i = h*W+w.
    row = jnp.arange(HW) // W
    col = jnp.arange(HW) % W
    p_h = (row[:, None] == jnp.arange(H)[None, :]).astype(f32) / W   # (HW, H)
    p_w = (col[:, None] == jnp.arange(W)[None, :]).astype(f32) / H   # (HW, W)
    p_cat = jnp.concatenate([p_h, p_w], axis=1)                      # (HW, H+W)
    e_h = (jnp.arange(H)[:, None] == row[None, :]).astype(f32)       # (H, HW)
    e_w = (jnp.arange(W)[:, None] == col[None, :]).astype(f32)       # (W, HW)

    # Fold BatchNorm (inference) into the 1x1 conv: y = (W1*scale) x + bias.
    scale = bn_gamma.astype(f32) / jnp.sqrt(bn_var.astype(f32) + eps)  # (Cr,)
    w1f = w1.astype(f32) * scale[:, None]                              # (Cr, C)
    b1f = (bn_beta.astype(f32) - bn_mean.astype(f32) * scale).reshape(Cr, 1)

    whf = wh.astype(f32)
    wwf = ww.astype(f32)

    bt = max(1, min(batch_block, B))
    n_blocks = pl.cdiv(B, bt)

    def const2d(shape):
        return pl.BlockSpec(shape, lambda b: (0, 0))

    out = pl.pallas_call(
        _attention_kernel,
        out_shape=jax.ShapeDtypeStruct((B, C, HW), io_dtype),
        grid_spec=pltpu.PrefetchScalarGridSpec(
            num_scalar_prefetch=0,
            grid=(n_blocks,),
            in_specs=[
                pl.BlockSpec((bt, C, HW), lambda b: (b, 0, 0)),   # x1
                pl.BlockSpec((bt, C, HW), lambda b: (b, 0, 0)),   # x2
                const2d((C, C)),                                  # a_eca
                const2d((HW, H + W)),                             # [p_h | p_w]
                const2d((H, HW)),                                 # e_h
                const2d((W, HW)),                                 # e_w
                const2d((Cr, C)),                                 # w1 (BN folded)
                const2d((Cr, 1)),                                 # b1 (BN folded)
                const2d((C, Cr)),                                 # F_h
                const2d((C, Cr)),                                 # F_w
            ],
            out_specs=pl.BlockSpec((bt, C, HW), lambda b: (b, 0, 0)),
        ),
        compiler_params=pltpu.CompilerParams(
            dimension_semantics=("parallel",)),
    )(x1f, x2f, a_eca, p_cat, e_h, e_w, w1f, b1f, whf, wwf)

    # Contiguous reshape back to NCHW (no transpose needed).
    return out.reshape(B, C, H, W)


def _reference(x1, x2, w_eca, w1, bn_gamma, bn_beta, bn_mean, bn_var,
               wh, ww, eps=1e-5):
    """Pure-JAX mirror of the PyTorch attention_model forward (eval mode)."""
    B, C, H, W = x1.shape
    x1 = x1.astype(jnp.float32)
    x2 = x2.astype(jnp.float32)

    # channel_att
    pooled = jnp.mean(x1, axis=(2, 3))                         # (B, C)
    k = w_eca.shape[-1]
    pad = (k - 1) // 2
    y = lax.conv_general_dilated(
        pooled[:, None, :], w_eca.reshape(1, 1, k).astype(jnp.float32),
        window_strides=(1,), padding=((pad, pad),),
        dimension_numbers=('NCH', 'OIH', 'NCH'))               # (B, 1, C)
    attn = jax.nn.sigmoid(y)[:, 0, :, None, None]              # (B, C, 1, 1)
    z = x1 * attn + x2

    # local_att
    x_h = jnp.transpose(jnp.mean(z, axis=3, keepdims=True), (0, 1, 3, 2))
    x_w = jnp.mean(z, axis=2, keepdims=True)
    cat = jnp.concatenate([x_h, x_w], axis=3)                  # (B, C, 1, H+W)
    t = jnp.einsum('oc,bcxy->boxy', w1.astype(jnp.float32), cat)
    scale = bn_gamma / jnp.sqrt(bn_var + eps)
    t = t * scale[None, :, None, None] \
        + (bn_beta - bn_mean * scale)[None, :, None, None]
    t = jnp.maximum(t, 0.0)
    t_h, t_w = t[..., :H], t[..., H:]
    s_h = jax.nn.sigmoid(jnp.einsum('oc,bcxy->boxy', wh.astype(jnp.float32),
                                    jnp.transpose(t_h, (0, 1, 3, 2))))
    s_w = jax.nn.sigmoid(jnp.einsum('oc,bcxy->boxy', ww.astype(jnp.float32),
                                    t_w))
    return z * s_h * s_w


if __name__ == "__main__":
    key = jax.random.PRNGKey(0)
    B, C, H, W = 2, 32, 16, 16
    reduction = 16
    Cr = C // reduction

    # Same ECA kernel-size formula as the PyTorch module (b=1, gamma=2).
    k_eca = int(abs((math.log2(C) + 1) / 2))
    k_eca = k_eca if k_eca % 2 else k_eca + 1

    keys = jax.random.split(key, 10)
    x1 = jax.random.normal(keys[0], (B, C, H, W), jnp.float32)
    x2 = jax.random.normal(keys[1], (B, C, H, W), jnp.float32)

    # Conv weights with PyTorch-like uniform(-1/sqrt(fan_in), 1/sqrt(fan_in)).
    w_eca = jax.random.uniform(keys[2], (1, 1, k_eca), jnp.float32,
                               -1.0 / math.sqrt(k_eca), 1.0 / math.sqrt(k_eca))
    w1 = jax.random.uniform(keys[3], (Cr, C), jnp.float32,
                            -1.0 / math.sqrt(C), 1.0 / math.sqrt(C))
    wh = jax.random.uniform(keys[4], (C, Cr), jnp.float32,
                            -1.0 / math.sqrt(Cr), 1.0 / math.sqrt(Cr))
    ww = jax.random.uniform(keys[5], (C, Cr), jnp.float32,
                            -1.0 / math.sqrt(Cr), 1.0 / math.sqrt(Cr))
    # BatchNorm2d params / running stats (inference semantics).
    bn_gamma = 1.0 + 0.1 * jax.random.normal(keys[6], (Cr,), jnp.float32)
    bn_beta = 0.1 * jax.random.normal(keys[7], (Cr,), jnp.float32)
    bn_mean = 0.05 * jax.random.normal(keys[8], (Cr,), jnp.float32)
    bn_var = jnp.abs(1.0 + 0.1 * jax.random.normal(keys[9], (Cr,), jnp.float32))

    out = attention_model(x1, x2, w_eca, w1, bn_gamma, bn_beta, bn_mean,
                          bn_var, wh, ww)
    out = jax.block_until_ready(out)

    ref = _reference(x1, x2, w_eca, w1, bn_gamma, bn_beta, bn_mean, bn_var,
                     wh, ww)
    assert out.shape == (B, C, H, W)
    assert jnp.allclose(out, ref, atol=1e-4, rtol=1e-4), "mismatch vs reference"

    print("KERNEL_OK")
</pallas_src>

<mosaic_0001>
module attributes {stable_mosaic.version = 11 : i64} {
  func.func @_attention_kernel(%arg0: i32, %arg1: memref<1x32x256xf32, #tpu.memory_space<vmem>>, %arg2: memref<1x32x256xf32, #tpu.memory_space<vmem>>, %arg3: memref<32x32xf32, #tpu.memory_space<vmem>>, %arg4: memref<256x32xf32, #tpu.memory_space<vmem>>, %arg5: memref<16x256xf32, #tpu.memory_space<vmem>>, %arg6: memref<16x256xf32, #tpu.memory_space<vmem>>, %arg7: memref<2x32xf32, #tpu.memory_space<vmem>>, %arg8: memref<2x1xf32, #tpu.memory_space<vmem>>, %arg9: memref<32x2xf32, #tpu.memory_space<vmem>>, %arg10: memref<32x2xf32, #tpu.memory_space<vmem>>, %arg11: memref<1x32x256xf32, #tpu.memory_space<vmem>>) attributes {dimension_semantics = [#tpu.dimension_semantics<parallel>], iteration_bounds = array<i64: 2>, scalar_prefetch = 0 : i64, scratch_operands = 0 : i64, tpu.core_type = #tpu.core_type<tc>, window_params = [{transform_indices = @transform_0, window_bounds = array<i64: 1, 32, 256>}, {transform_indices = @transform_1, window_bounds = array<i64: 1, 32, 256>}, {pipeline_mode = #tpu.pipeline_mode<synchronous>, transform_indices = @transform_2, window_bounds = array<i64: 32, 32>}, {pipeline_mode = #tpu.pipeline_mode<synchronous>, transform_indices = @transform_3, window_bounds = array<i64: 256, 32>}, {pipeline_mode = #tpu.pipeline_mode<synchronous>, transform_indices = @transform_4, window_bounds = array<i64: 16, 256>}, {pipeline_mode = #tpu.pipeline_mode<synchronous>, transform_indices = @transform_5, window_bounds = array<i64: 16, 256>}, {pipeline_mode = #tpu.pipeline_mode<synchronous>, transform_indices = @transform_6, window_bounds = array<i64: 2, 32>}, {pipeline_mode = #tpu.pipeline_mode<synchronous>, transform_indices = @transform_7, window_bounds = array<i64: 2, 1>}, {pipeline_mode = #tpu.pipeline_mode<synchronous>, transform_indices = @transform_8, window_bounds = array<i64: 32, 2>}, {pipeline_mode = #tpu.pipeline_mode<synchronous>, transform_indices = @transform_9, window_bounds = array<i64: 32, 2>}, {transform_indices = @transform_10, window_bounds = array<i64: 1, 32, 256>}]} {
    %c0 = arith.constant 0 : index
    %c0_0 = arith.constant 0 : index
    %c0_1 = arith.constant 0 : index
    %0 = vector.load %arg1[%c0, %c0_0, %c0_1] : memref<1x32x256xf32, #tpu.memory_space<vmem>>, vector<1x32x256xf32>
    %1 = vector.shape_cast %0 : vector<1x32x256xf32> to vector<32x256xf32>
    %c0_2 = arith.constant 0 : index
    %c0_3 = arith.constant 0 : index
    %c0_4 = arith.constant 0 : index
    %2 = vector.load %arg2[%c0_2, %c0_3, %c0_4] : memref<1x32x256xf32, #tpu.memory_space<vmem>>, vector<1x32x256xf32>
    %3 = vector.shape_cast %2 : vector<1x32x256xf32> to vector<32x256xf32>
    %cst = arith.constant dense<0.000000e+00> : vector<32xf32>
    %4 = vector.multi_reduction <add>, %1, %cst [1] : vector<32x256xf32> to vector<32xf32>
    %5 = vector.shape_cast %4 : vector<32xf32> to vector<32x1xf32>
    %cst_5 = arith.constant 2.560000e+02 : f32
    %6 = vector.broadcast %cst_5 : f32 to vector<32x1xf32>
    %7 = arith.divf %5, %6 : vector<32x1xf32>
    %c0_6 = arith.constant 0 : index
    %c0_7 = arith.constant 0 : index
    %8 = vector.load %arg3[%c0_6, %c0_7] : memref<32x32xf32, #tpu.memory_space<vmem>>, vector<32x32xf32>
    %cst_8 = arith.constant dense<0.000000e+00> : vector<32x1xf32>
    %9 = tpu.matmul %8, %7, %cst_8 {dimension_numbers = #tpu.dot_dimension_numbers<[1], [0], [0], [1], [0, 0, 1, 1], [], []>} : vector<32x32xf32>, vector<32x1xf32>, vector<32x1xf32> -> vector<32x1xf32>
    %10 = arith.negf %9 : vector<32x1xf32>
    %11 = math.exp %10 : vector<32x1xf32>
    %cst_9 = arith.constant 1.000000e+00 : f32
    %12 = vector.broadcast %cst_9 : f32 to vector<32x1xf32>
    %13 = arith.addf %12, %11 : vector<32x1xf32>
    %14 = arith.divf %12, %13 : vector<32x1xf32>
    %15 = vector.broadcast %14 : vector<32x1xf32> to vector<32x256xf32>
    %16 = arith.mulf %1, %15 : vector<32x256xf32>
    %17 = arith.addf %16, %3 : vector<32x256xf32>
    %c0_10 = arith.constant 0 : index
    %c0_11 = arith.constant 0 : index
    %18 = vector.load %arg7[%c0_10, %c0_11] : memref<2x32xf32, #tpu.memory_space<vmem>>, vector<2x32xf32>
    %cst_12 = arith.constant dense<0.000000e+00> : vector<2x256xf32>
    %19 = tpu.matmul %18, %17, %cst_12 {dimension_numbers = #tpu.dot_dimension_numbers<[1], [0], [0], [1], [0, 0, 1, 1], [], []>} : vector<2x32xf32>, vector<32x256xf32>, vector<2x256xf32> -> vector<2x256xf32>
    %c0_13 = arith.constant 0 : index
    %c0_14 = arith.constant 0 : index
    %20 = vector.load %arg4[%c0_13, %c0_14] : memref<256x32xf32, #tpu.memory_space<vmem>>, vector<256x32xf32>
    %cst_15 = arith.constant dense<0.000000e+00> : vector<2x32xf32>
    %21 = tpu.matmul %19, %20, %cst_15 {dimension_numbers = #tpu.dot_dimension_numbers<[1], [0], [0], [1], [0, 0, 1, 1], [], []>} : vector<2x256xf32>, vector<256x32xf32>, vector<2x32xf32> -> vector<2x32xf32>
    %c0_16 = arith.constant 0 : index
    %c0_17 = arith.constant 0 : index
    %22 = vector.load %arg8[%c0_16, %c0_17] : memref<2x1xf32, #tpu.memory_space<vmem>>, vector<2x1xf32>
    %23 = vector.broadcast %22 : vector<2x1xf32> to vector<2x32xf32>
    %24 = arith.addf %21, %23 : vector<2x32xf32>
    %cst_18 = arith.constant 0.000000e+00 : f32
    %25 = vector.broadcast %cst_18 : f32 to vector<2x32xf32>
    %26 = arith.maximumf %24, %25 : vector<2x32xf32>
    %27 = vector.extract_strided_slice %26 {offsets = [0, 0], sizes = [2, 16], strides = [1, 1]} : vector<2x32xf32> to vector<2x16xf32>
    %28 = vector.extract_strided_slice %26 {offsets = [0, 16], sizes = [2, 16], strides = [1, 1]} : vector<2x32xf32> to vector<2x16xf32>
    %c0_19 = arith.constant 0 : index
    %c0_20 = arith.constant 0 : index
    %29 = vector.load %arg5[%c0_19, %c0_20] : memref<16x256xf32, #tpu.memory_space<vmem>>, vector<16x256xf32>
    %cst_21 = arith.constant dense<0.000000e+00> : vector<2x256xf32>
    %30 = tpu.matmul %27, %29, %cst_21 {dimension_numbers = #tpu.dot_dimension_numbers<[1], [0], [0], [1], [0, 0, 1, 1], [], []>} : vector<2x16xf32>, vector<16x256xf32>, vector<2x256xf32> -> vector<2x256xf32>
    %c0_22 = arith.constant 0 : index
    %c0_23 = arith.constant 0 : index
    %31 = vector.load %arg6[%c0_22, %c0_23] : memref<16x256xf32, #tpu.memory_space<vmem>>, vector<16x256xf32>
    %cst_24 = arith.constant dense<0.000000e+00> : vector<2x256xf32>
    %32 = tpu.matmul %28, %31, %cst_24 {dimension_numbers = #tpu.dot_dimension_numbers<[1], [0], [0], [1], [0, 0, 1, 1], [], []>} : vector<2x16xf32>, vector<16x256xf32>, vector<2x256xf32> -> vector<2x256xf32>
    %c0_25 = arith.constant 0 : index
    %c0_26 = arith.constant 0 : index
    %33 = vector.load %arg9[%c0_25, %c0_26] : memref<32x2xf32, #tpu.memory_space<vmem>>, vector<32x2xf32>
    %cst_27 = arith.constant dense<0.000000e+00> : vector<32x256xf32>
    %34 = tpu.matmul %33, %30, %cst_27 {dimension_numbers = #tpu.dot_dimension_numbers<[1], [0], [0], [1], [0, 0, 1, 1], [], []>} : vector<32x2xf32>, vector<2x256xf32>, vector<32x256xf32> -> vector<32x256xf32>
    %35 = arith.negf %34 : vector<32x256xf32>
    %36 = math.exp %35 : vector<32x256xf32>
    %cst_28 = arith.constant 1.000000e+00 : f32
    %37 = vector.broadcast %cst_28 : f32 to vector<32x256xf32>
    %38 = arith.addf %37, %36 : vector<32x256xf32>
    %39 = arith.divf %37, %38 : vector<32x256xf32>
    %c0_29 = arith.constant 0 : index
    %c0_30 = arith.constant 0 : index
    %40 = vector.load %arg10[%c0_29, %c0_30] : memref<32x2xf32, #tpu.memory_space<vmem>>, vector<32x2xf32>
    %cst_31 = arith.constant dense<0.000000e+00> : vector<32x256xf32>
    %41 = tpu.matmul %40, %32, %cst_31 {dimension_numbers = #tpu.dot_dimension_numbers<[1], [0], [0], [1], [0, 0, 1, 1], [], []>} : vector<32x2xf32>, vector<2x256xf32>, vector<32x256xf32> -> vector<32x256xf32>
    %42 = arith.negf %41 : vector<32x256xf32>
    %43 = math.exp %42 : vector<32x256xf32>
    %cst_32 = arith.constant 1.000000e+00 : f32
    %44 = vector.broadcast %cst_32 : f32 to vector<32x256xf32>
    %45 = arith.addf %44, %43 : vector<32x256xf32>
    %46 = arith.divf %44, %45 : vector<32x256xf32>
    %47 = arith.mulf %17, %39 : vector<32x256xf32>
    %48 = arith.mulf %47, %46 : vector<32x256xf32>
    %c0_33 = arith.constant 0 : index
    %c0_34 = arith.constant 0 : index
    %c0_35 = arith.constant 0 : index
    %49 = vector.load %arg11[%c0_33, %c0_34, %c0_35] : memref<1x32x256xf32, #tpu.memory_space<vmem>>, vector<1x32x256xf32>
    %50 = vector.shape_cast %49 : vector<1x32x256xf32> to vector<32x256xf32>
    %51 = vector.shape_cast %48 : vector<32x256xf32> to vector<1x32x256xf32>
    tpu.vector_store %arg11[%c0_33, %c0_34, %c0_35], %51 {strides = array<i32>} : memref<1x32x256xf32, #tpu.memory_space<vmem>>, vector<1x32x256xf32>,
    return
  }
  func.func @transform_0(%arg0: i32) -> (i32, i32, i32) {
    %c0_i32 = arith.constant 0 : i32
    %c0_i32_0 = arith.constant 0 : i32
    %c0_i32_1 = arith.constant 0 : i32
    return %arg0, %c0_i32, %c0_i32_0 : i32, i32, i32
  }
  func.func @transform_1(%arg0: i32) -> (i32, i32, i32) {
    %c0_i32 = arith.constant 0 : i32
    %c0_i32_0 = arith.constant 0 : i32
    %c0_i32_1 = arith.constant 0 : i32
    return %arg0, %c0_i32, %c0_i32_0 : i32, i32, i32
  }
  func.func @transform_2(%arg0: i32) -> (i32, i32) {
    %c0_i32 = arith.constant 0 : i32
    %c0_i32_0 = arith.constant 0 : i32
    %c0_i32_1 = arith.constant 0 : i32
    return %c0_i32, %c0_i32_0 : i32, i32
  }
  func.func @transform_3(%arg0: i32) -> (i32, i32) {
    %c0_i32 = arith.constant 0 : i32
    %c0_i32_0 = arith.constant 0 : i32
    %c0_i32_1 = arith.constant 0 : i32
    return %c0_i32, %c0_i32_0 : i32, i32
  }
  func.func @transform_4(%arg0: i32) -> (i32, i32) {
    %c0_i32 = arith.constant 0 : i32
    %c0_i32_0 = arith.constant 0 : i32
    %c0_i32_1 = arith.constant 0 : i32
    return %c0_i32, %c0_i32_0 : i32, i32
  }
  func.func @transform_5(%arg0: i32) -> (i32, i32) {
    %c0_i32 = arith.constant 0 : i32
    %c0_i32_0 = arith.constant 0 : i32
    %c0_i32_1 = arith.constant 0 : i32
    return %c0_i32, %c0_i32_0 : i32, i32
  }
  func.func @transform_6(%arg0: i32) -> (i32, i32) {
    %c0_i32 = arith.constant 0 : i32
    %c0_i32_0 = arith.constant 0 : i32
    %c0_i32_1 = arith.constant 0 : i32
    return %c0_i32, %c0_i32_0 : i32, i32
  }
  func.func @transform_7(%arg0: i32) -> (i32, i32) {
    %c0_i32 = arith.constant 0 : i32
    %c0_i32_0 = arith.constant 0 : i32
    %c0_i32_1 = arith.constant 0 : i32
    return %c0_i32, %c0_i32_0 : i32, i32
  }
  func.func @transform_8(%arg0: i32) -> (i32, i32) {
    %c0_i32 = arith.constant 0 : i32
    %c0_i32_0 = arith.constant 0 : i32
    %c0_i32_1 = arith.constant 0 : i32
    return %c0_i32, %c0_i32_0 : i32, i32
  }
  func.func @transform_9(%arg0: i32) -> (i32, i32) {
    %c0_i32 = arith.constant 0 : i32
    %c0_i32_0 = arith.constant 0 : i32
    %c0_i32_1 = arith.constant 0 : i32
    return %c0_i32, %c0_i32_0 : i32, i32
  }
  func.func @transform_10(%arg0: i32) -> (i32, i32, i32) {
    %c0_i32 = arith.constant 0 : i32
    %c0_i32_0 = arith.constant 0 : i32
    %c0_i32_1 = arith.constant 0 : i32
    return %arg0, %c0_i32, %c0_i32_0 : i32, i32, i32
  }
}

</mosaic_0001>

<llo_original>
// kernel: tpu_custom_call.1
$region0: #{tpu_custom_call.1}
  #allocation0 [shape = 'u32[]', space=smem, size = 0x4, offset = 0x4, fixed_abs, tag = 'smem constant byte address 0x4 - core index']
  #allocation1 [shape = 'u32[72,128]{1,0:T(1,128)}', space=vmem, size = 0x9000, scoped, tag = 'internal scratch']
  %s0 = inlined_call_operand.vmem [shape: f32[2,32,256], index: 0, kind: input, shape index: {}]
  %s1 = inlined_call_operand.vmem [shape: f32[2,32,256], index: 1, kind: input, shape index: {}]
  %s2 = inlined_call_operand.vmem [shape: f32[32,32], index: 2, kind: input, shape index: {}]
  %s3 = inlined_call_operand.vmem [shape: f32[256,32], index: 3, kind: input, shape index: {}]
  %s4 = inlined_call_operand.vmem [shape: f32[16,256], index: 4, kind: input, shape index: {}]
  %s5 = inlined_call_operand.hbm [shape: f32[16,256], index: 5, kind: input, shape index: {}]
  %s6 = inlined_call_operand.vmem [shape: f32[2,32], index: 6, kind: input, shape index: {}]
  %s7 = inlined_call_operand.vmem [shape: f32[2,1], index: 7, kind: input, shape index: {}]
  %s8 = inlined_call_operand.vmem [shape: f32[32,2], index: 8, kind: input, shape index: {}]
  %s9 = inlined_call_operand.vmem [shape: f32[32,2], index: 9, kind: input, shape index: {}]
  %s10 = inlined_call_operand.hbm [shape: f32[2,32,256], index: 10, kind: output, shape index: {}]
  %s11 = sld [smem:[#allocation0]]
  $region77: #{tpu_custom_call.1} parent=0
    _
  %s13 = ssub.s32 1, %s11
  %s14 = scalar_select 0, %s13, %s11
  $region1: #{tpu_custom_call.1} parent=0
    #allocation2 [shape = 'u8[16384]{0}', space=vmem, size = 0x4000, scoped, tag = 'input window, operand 5, single buffered']
    #allocation3 [shape = 's32[2]{0}', space=sflag, size = 0x8, scoped, tag = 'scoped memory for tpu_custom_call.1']
    #allocation4 [shape = 's32[2]{0}', space=sflag, size = 0x8, scoped, tag = 'scoped memory for tpu_custom_call.1']
    #allocation5 [shape = 'u8[65536]{0}', space=vmem, size = 0x10000, scoped, tag = 'output window, operand 0']
    %15 = vsyncpa [#allocation3], 0
    %16 = vsyncpa [#allocation4], 0
    %s17 = scalar_lea.sflag [#allocation4], 1
    %18 = vsyncpa %s17, 0
    loop: start=0, step=1, limit=4
    $region2: #{tpu_custom_call.1} parent=1 // loop_pre_header
      _
    $region3: #{tpu_custom_call.1} parent=1 // loop_header
      %s20 = sphi 0, %s24
      %p21 = scmp.ge.s32.totalorder %s20, 4
      %s30 = sphi 0, %s32
      %s33 = sphi 0, %s30
      %s34 = sphi 0, %s33
      %s50 = sphi 0, %s34
      %s56 = sphi 0, %s58
      %s59 = sphi 0, %s56
      %s60 = sphi 0, %s59
      %s76 = sphi 0, %s60
      %s80 = sphi 0, %s80
      %s82 = sphi 0, %s80
      %s83 = sphi 0, %s82
      %s97 = sphi 0, %s83
      %s101 = sphi 0, %s101
      %s103 = sphi 0, %s101
      %s104 = sphi 0, %s103
      %s118 = sphi 0, %s104
      %s122 = sphi 0, %s122
      %s124 = sphi 0, %s122
      %s125 = sphi 0, %s124
      %s139 = sphi 0, %s125
      %s143 = sphi 0, %s143
      %s145 = sphi 0, %s143
      %s146 = sphi 0, %s145
      %s160 = sphi 0, %s146
      %s164 = sphi 0, %s164
      %s166 = sphi 0, %s164
      %s167 = sphi 0, %s166
      %s181 = sphi 0, %s167
      %s185 = sphi 0, %s185
      %s187 = sphi 0, %s185
      %s188 = sphi 0, %s187
      %s202 = sphi 0, %s188
      %s206 = sphi 0, %s206
      %s208 = sphi 0, %s206
      %s209 = sphi 0, %s208
      %s223 = sphi 0, %s209
      %s227 = sphi 0, %s227
      %s229 = sphi 0, %s227
      %s230 = sphi 0, %s229
      %s244 = sphi 0, %s230
      %s250 = sphi 0, %s252
      %s253 = sphi 0, %s250
      %s254 = sphi 0, %s253
      %s270 = sphi 0, %s254
    $region4: #{tpu_custom_call.1} parent=1 // loop_header_branch
      %23 = sbr.rel (%p21) target = $region8
    $region5: #{tpu_custom_call.1} parent=1 // loop_body
      %s25 = ssub.s32 %s20, 1
      %s26 = ssub.s32 %s20, 2
      %s27 = sadd.s32 %s20, 1
      %s28 = ssub.s32 %s20, %s27
      %p29 = scmp.eq.s32.totalorder %s28, 0
      %s31 = sadd.s32 %s30, 1
      %s32 = scalar_select %p29, %s30, %s31
      %p35 = pneg %p29
      %p36 = scmp.eq.s32.totalorder %s20, 1
      %p37 = por %p35, %p36
      %p38 = scmp.ne.s32.totalorder %s30, %s33
      %p39 = scmp.eq.s32.totalorder %s20, 0
      %p40 = por %p38, %p39
      %p41 = scmp.ne.s32.totalorder %s30, %s33
      %p42 = scmp.eq.s32.totalorder %s25, 1
      %p43 = por %p41, %p42
      %p44 = scmp.ne.s32.totalorder %s33, %s34
      %p45 = scmp.eq.s32.totalorder %s25, 0
      %p46 = por %p44, %p45
      %p47 = scmp.ne.s32.totalorder %s33, %s34
      %p48 = scmp.eq.s32.totalorder %s26, 1
      %p49 = por %p47, %p48
      %p51 = scmp.ne.s32.totalorder %s34, %s50
      %p52 = scmp.eq.s32.totalorder %s26, 0
      %p53 = por %p51, %p52
      %s54 = ssub.s32 %s20, %s27
      %p55 = scmp.eq.s32.totalorder %s54, 0
      %s57 = sadd.s32 %s56, 1
      %s58 = scalar_select %p55, %s56, %s57
      %p61 = pneg %p55
      %p62 = scmp.eq.s32.totalorder %s20, 1
      %p63 = por %p61, %p62
      %p64 = scmp.ne.s32.totalorder %s56, %s59
      %p65 = scmp.eq.s32.totalorder %s20, 0
      %p66 = por %p64, %p65
      %p67 = scmp.ne.s32.totalorder %s56, %s59
      %p68 = scmp.eq.s32.totalorder %s25, 1
      %p69 = por %p67, %p68
      %p70 = scmp.ne.s32.totalorder %s59, %s60
      %p71 = scmp.eq.s32.totalorder %s25, 0
      %p72 = por %p70, %p71
      %p73 = scmp.ne.s32.totalorder %s59, %s60
      %p74 = scmp.eq.s32.totalorder %s26, 1
      %p75 = por %p73, %p74
      %p77 = scmp.ne.s32.totalorder %s60, %s76
      %p78 = scmp.eq.s32.totalorder %s26, 0
      %p79 = por %p77, %p78
      %s81 = sadd.s32 %s80, 1
      %p84 = scmp.eq.s32.totalorder %s20, 1
      %p85 = scmp.ne.s32.totalorder %s80, %s82
      %p86 = scmp.eq.s32.totalorder %s20, 0
      %p87 = por %p85, %p86
      %p88 = scmp.ne.s32.totalorder %s80, %s82
      %p89 = scmp.eq.s32.totalorder %s25, 1
      %p90 = por %p88, %p89
      %p91 = scmp.ne.s32.totalorder %s82, %s83
      %p92 = scmp.eq.s32.totalorder %s25, 0
      %p93 = por %p91, %p92
      %p94 = scmp.ne.s32.totalorder %s82, %s83
      %p95 = scmp.eq.s32.totalorder %s26, 1
      %p96 = por %p94, %p95
      %p98 = scmp.ne.s32.totalorder %s83, %s97
      %p99 = scmp.eq.s32.totalorder %s26, 0
      %p100 = por %p98, %p99
      %s102 = sadd.s32 %s101, 1
      %p105 = scmp.eq.s32.totalorder %s20, 1
      %p106 = scmp.ne.s32.totalorder %s101, %s103
      %p107 = scmp.eq.s32.totalorder %s20, 0
      %p108 = por %p106, %p107
      %p109 = scmp.ne.s32.totalorder %s101, %s103
      %p110 = scmp.eq.s32.totalorder %s25, 1
      %p111 = por %p109, %p110
      %p112 = scmp.ne.s32.totalorder %s103, %s104
      %p113 = scmp.eq.s32.totalorder %s25, 0
      %p114 = por %p112, %p113
      %p115 = scmp.ne.s32.totalorder %s103, %s104
      %p116 = scmp.eq.s32.totalorder %s26, 1
      %p117 = por %p115, %p116
      %p119 = scmp.ne.s32.totalorder %s104, %s118
      %p120 = scmp.eq.s32.totalorder %s26, 0
      %p121 = por %p119, %p120
      %s123 = sadd.s32 %s122, 1
      %p126 = scmp.eq.s32.totalorder %s20, 1
      %p127 = scmp.ne.s32.totalorder %s122, %s124
      %p128 = scmp.eq.s32.totalorder %s20, 0
      %p129 = por %p127, %p128
      %p130 = scmp.ne.s32.totalorder %s122, %s124
      %p131 = scmp.eq.s32.totalorder %s25, 1
      %p132 = por %p130, %p131
      %p133 = scmp.ne.s32.totalorder %s124, %s125
      %p134 = scmp.eq.s32.totalorder %s25, 0
      %p135 = por %p133, %p134
      %p136 = scmp.ne.s32.totalorder %s124, %s125
      %p137 = scmp.eq.s32.totalorder %s26, 1
      %p138 = por %p136, %p137
      %p140 = scmp.ne.s32.totalorder %s125, %s139
      %p141 = scmp.eq.s32.totalorder %s26, 0
      %p142 = por %p140, %p141
      %s144 = sadd.s32 %s143, 1
      %p147 = scmp.eq.s32.totalorder %s20, 1
      %p148 = scmp.ne.s32.totalorder %s143, %s145
      %p149 = scmp.eq.s32.totalorder %s20, 0
      %p150 = por %p148, %p149
      %p151 = scmp.ne.s32.totalorder %s143, %s145
      %p152 = scmp.eq.s32.totalorder %s25, 1
      %p153 = por %p151, %p152
      %p154 = scmp.ne.s32.totalorder %s145, %s146
      %p155 = scmp.eq.s32.totalorder %s25, 0
      %p156 = por %p154, %p155
      %p157 = scmp.ne.s32.totalorder %s145, %s146
      %p158 = scmp.eq.s32.totalorder %s26, 1
      %p159 = por %p157, %p158
      %p161 = scmp.ne.s32.totalorder %s146, %s160
      %p162 = scmp.eq.s32.totalorder %s26, 0
      %p163 = por %p161, %p162
      %s165 = sadd.s32 %s164, 1
      %p168 = scmp.eq.s32.totalorder %s20, 1
      %p169 = scmp.ne.s32.totalorder %s164, %s166
      %p170 = scmp.eq.s32.totalorder %s20, 0
      %p171 = por %p169, %p170
      %p172 = scmp.ne.s32.totalorder %s164, %s166
      %p173 = scmp.eq.s32.totalorder %s25, 1
      %p174 = por %p172, %p173
      %p175 = scmp.ne.s32.totalorder %s166, %s167
      %p176 = scmp.eq.s32.totalorder %s25, 0
      %p177 = por %p175, %p176
      %p178 = scmp.ne.s32.totalorder %s166, %s167
      %p179 = scmp.eq.s32.totalorder %s26, 1
      %p180 = por %p178, %p179
      %p182 = scmp.ne.s32.totalorder %s167, %s181
      %p183 = scmp.eq.s32.totalorder %s26, 0
      %p184 = por %p182, %p183
      %s186 = sadd.s32 %s185, 1
      %p189 = scmp.eq.s32.totalorder %s20, 1
      %p190 = scmp.ne.s32.totalorder %s185, %s187
      %p191 = scmp.eq.s32.totalorder %s20, 0
      %p192 = por %p190, %p191
      %p193 = scmp.ne.s32.totalorder %s185, %s187
      %p194 = scmp.eq.s32.totalorder %s25, 1
      %p195 = por %p193, %p194
      %p196 = scmp.ne.s32.totalorder %s187, %s188
      %p197 = scmp.eq.s32.totalorder %s25, 0
      %p198 = por %p196, %p197
      %p199 = scmp.ne.s32.totalorder %s187, %s188
      %p200 = scmp.eq.s32.totalorder %s26, 1
      %p201 = por %p199, %p200
      %p203 = scmp.ne.s32.totalorder %s188, %s202
      %p204 = scmp.eq.s32.totalorder %s26, 0
      %p205 = por %p203, %p204
      %s207 = sadd.s32 %s206, 1
      %p210 = scmp.eq.s32.totalorder %s20, 1
      %p211 = scmp.ne.s32.totalorder %s206, %s208
      %p212 = scmp.eq.s32.totalorder %s20, 0
      %p213 = por %p211, %p212
      %p214 = scmp.ne.s32.totalorder %s206, %s208
      %p215 = scmp.eq.s32.totalorder %s25, 1
      %p216 = por %p214, %p215
      %p217 = scmp.ne.s32.totalorder %s208, %s209
      %p218 = scmp.eq.s32.totalorder %s25, 0
      %p219 = por %p217, %p218
      %p220 = scmp.ne.s32.totalorder %s208, %s209
      %p221 = scmp.eq.s32.totalorder %s26, 1
      %p222 = por %p220, %p221
      %p224 = scmp.ne.s32.totalorder %s209, %s223
      %p225 = scmp.eq.s32.totalorder %s26, 0
      %p226 = por %p224, %p225
      %s228 = sadd.s32 %s227, 1
      %p231 = scmp.eq.s32.totalorder %s20, 1
      %p232 = scmp.ne.s32.totalorder %s227, %s229
      %p233 = scmp.eq.s32.totalorder %s20, 0
      %p234 = por %p232, %p233
      %p235 = scmp.ne.s32.totalorder %s227, %s229
      %p236 = scmp.eq.s32.totalorder %s25, 1
      %p237 = por %p235, %p236
      %p238 = scmp.ne.s32.totalorder %s229, %s230
      %p239 = scmp.eq.s32.totalorder %s25, 0
      %p240 = por %p238, %p239
      %p241 = scmp.ne.s32.totalorder %s229, %s230
      %p242 = scmp.eq.s32.totalorder %s26, 1
      %p243 = por %p241, %p242
      %p245 = scmp.ne.s32.totalorder %s230, %s244
      %p246 = scmp.eq.s32.totalorder %s26, 0
      %p247 = por %p245, %p246
      %s248 = ssub.s32 %s20, %s27
      %p249 = scmp.eq.s32.totalorder %s248, 0
      %s251 = sadd.s32 %s250, 1
      %s252 = scalar_select %p249, %s250, %s251
      %p255 = pneg %p249
      %p256 = scmp.eq.s32.totalorder %s20, 1
      %p257 = por %p255, %p256
      %p258 = scmp.ne.s32.totalorder %s250, %s253
      %p259 = scmp.eq.s32.totalorder %s20, 0
      %p260 = por %p258, %p259
      %p261 = scmp.ne.s32.totalorder %s250, %s253
      %p262 = scmp.eq.s32.totalorder %s25, 1
      %p263 = por %p261, %p262
      %p264 = scmp.ne.s32.totalorder %s253, %s254
      %p265 = scmp.eq.s32.totalorder %s25, 0
      %p266 = por %p264, %p265
      %p267 = scmp.ne.s32.totalorder %s253, %s254
      %p268 = scmp.eq.s32.totalorder %s26, 1
      %p269 = por %p267, %p268
      %p271 = scmp.ne.s32.totalorder %s254, %s270
      %p272 = scmp.eq.s32.totalorder %s26, 0
      %p273 = por %p271, %p272
      %p274 = scmp.le.s32.totalorder 1, %s20
      %p275 = scmp.lt.s32.totalorder %s20, 3
      %p276 = pnand %p274, %p275
      %p277 = pneg %p276
      // Predicated region
      $region9: #{tpu_custom_call.1} parent=5 // pred_check
        _
      $region10: #{tpu_custom_call.1} parent=5 // pred_check_branch
        %279 = sbr.rel (%p276) target = $region12
      $region11: #{tpu_custom_call.1} parent=5 // pred_region
        %s280 = ssub.s32 %s20, 1
        // Predicated region
        $region13: #{tpu_custom_call.1} parent=11 // pred_check
          %p281 = pneg %p93
        $region14: #{tpu_custom_call.1} parent=11 // pred_check_branch
          %283 = sbr.rel (%p281) target = $region16
        $region15: #{tpu_custom_call.1} parent=11 // pred_region
          _
        $region16: #{tpu_custom_call.1} parent=11 // pred_fallthru
          _
        // Predicated region
        $region17: #{tpu_custom_call.1} parent=11 // pred_check
          %p284 = pneg %p114
        $region18: #{tpu_custom_call.1} parent=11 // pred_check_branch
          %286 = sbr.rel (%p284) target = $region20
        $region19: #{tpu_custom_call.1} parent=11 // pred_region
          _
        $region20: #{tpu_custom_call.1} parent=11 // pred_fallthru
          _
        // Predicated region
        $region21: #{tpu_custom_call.1} parent=11 // pred_check
          %p287 = pneg %p135
        $region22: #{tpu_custom_call.1} parent=11 // pred_check_branch
          %289 = sbr.rel (%p287) target = $region24
        $region23: #{tpu_custom_call.1} parent=11 // pred_region
          _
        $region24: #{tpu_custom_call.1} parent=11 // pred_fallthru
          _
        // Predicated region
        $region25: #{tpu_custom_call.1} parent=11 // pred_check
          %p290 = pneg %p156
        $region26: #{tpu_custom_call.1} parent=11 // pred_check_branch
          %292 = sbr.rel (%p290) target = $region28
        $region27: #{tpu_custom_call.1} parent=11 // pred_region
          %294 = vsyncadd [#allocation3], 0
          %s295 = sshll.u32 %s5, 4
          %s296 = int_to_ptr.hbm [resolvable:$true] %s295
          %s297 = sshll.u32 [#allocation2], 4
          %s298 = int_to_ptr.vmem [resolvable:$true] %s297
          %303 = dma.hbm_to_vmem [thread:$0]  %s296, 512, %s298, [#allocation3], 256, 256, 16
        $region28: #{tpu_custom_call.1} parent=11 // pred_fallthru
          _
        // Predicated region
        $region29: #{tpu_custom_call.1} parent=11 // pred_check
          %p304 = pneg %p177
        $region30: #{tpu_custom_call.1} parent=11 // pred_check_branch
          %306 = sbr.rel (%p304) target = $region32
        $region31: #{tpu_custom_call.1} parent=11 // pred_region
          _
        $region32: #{tpu_custom_call.1} parent=11 // pred_fallthru
          _
        // Predicated region
        $region33: #{tpu_custom_call.1} parent=11 // pred_check
          %p307 = pneg %p198
        $region34: #{tpu_custom_call.1} parent=11 // pred_check_branch
          %309 = sbr.rel (%p307) target = $region36
        $region35: #{tpu_custom_call.1} parent=11 // pred_region
          _
        $region36: #{tpu_custom_call.1} parent=11 // pred_fallthru
          _
        // Predicated region
        $region37: #{tpu_custom_call.1} parent=11 // pred_check
          %p310 = pneg %p219
        $region38: #{tpu_custom_call.1} parent=11 // pred_check_branch
          %312 = sbr.rel (%p310) target = $region40
        $region39: #{tpu_custom_call.1} parent=11 // pred_region
          _
        $region40: #{tpu_custom_call.1} parent=11 // pred_fallthru
          _
        // Predicated region
        $region41: #{tpu_custom_call.1} parent=11 // pred_check
          %p313 = pneg %p240
        $region42: #{tpu_custom_call.1} parent=11 // pred_check_branch
          %315 = sbr.rel (%p313) target = $region44
        $region43: #{tpu_custom_call.1} parent=11 // pred_region
          _
        $region44: #{tpu_custom_call.1} parent=11 // pred_fallthru
          _
      $region12: #{tpu_custom_call.1} parent=5 // pred_fallthru
        _
      %p316 = scmp.lt.s32.totalorder %s20, 2
      // Predicated region
      $region45: #{tpu_custom_call.1} parent=5 // pred_check
        %p317 = pneg %p316
      $region46: #{tpu_custom_call.1} parent=5 // pred_check_branch
        %319 = sbr.rel (%p317) target = $region48
      $region47: #{tpu_custom_call.1} parent=5 // pred_region
        // Predicated region
        $region49: #{tpu_custom_call.1} parent=47 // pred_check
          %p320 = pneg %p40
        $region50: #{tpu_custom_call.1} parent=47 // pred_check_branch
          %322 = sbr.rel (%p320) target = $region52
        $region51: #{tpu_custom_call.1} parent=47 // pred_region
          %p323 = scmp.lt.s32.totalorder %s20, 1
          %s324 = scalar_select %p323, %s20, 1
          %s325 = smul.addr %s324, 8
          %s326 = smul.addr %s325, 8
          %s327 = scalar_lea.vmem %s0, %s326
        $region52: #{tpu_custom_call.1} parent=47 // pred_fallthru
          _
        // Predicated region
        $region53: #{tpu_custom_call.1} parent=47 // pred_check
          %p328 = pneg %p66
        $region54: #{tpu_custom_call.1} parent=47 // pred_check_branch
          %330 = sbr.rel (%p328) target = $region56
        $region55: #{tpu_custom_call.1} parent=47 // pred_region
          %p331 = scmp.lt.s32.totalorder %s20, 1
          %s332 = scalar_select %p331, %s20, 1
          %s333 = smul.addr %s332, 8
          %s334 = smul.addr %s333, 8
          %s335 = scalar_lea.vmem %s1, %s334
        $region56: #{tpu_custom_call.1} parent=47 // pred_fallthru
          _
      $region48: #{tpu_custom_call.1} parent=5 // pred_fallthru
        _
      %p336 = scmp.le.s32.totalorder 1, %s20
      %p337 = scmp.lt.s32.totalorder %s20, 3
      %p338 = pnand %p336, %p337
      %p339 = pneg %p338
      // Predicated region
      $region57: #{tpu_custom_call.1} parent=5 // pred_check
        _
      $region58: #{tpu_custom_call.1} parent=5 // pred_check_branch
        %341 = sbr.rel (%p338) target = $region60
      $region59: #{tpu_custom_call.1} parent=5 // pred_region
        %s342 = ssub.s32 %s20, 1
        // Predicated region
        $region61: #{tpu_custom_call.1} parent=59 // pred_check
          %p343 = pneg %p156
        $region62: #{tpu_custom_call.1} parent=59 // pred_check_branch
          %345 = sbr.rel (%p343) target = $region64
        $region63: #{tpu_custom_call.1} parent=59 // pred_region
          %347 = dma.done [#allocation3], 512
        $region64: #{tpu_custom_call.1} parent=59 // pred_fallthru
          _
        %p348 = scmp.lt.s32.totalorder %s25, 1
        %s349 = scalar_select %p348, %s25, 1
        %s350 = smul.addr %s349, 8
        %s351 = smul.addr %s350, 8
        %s352 = scalar_lea.vmem %s0, %s351
        %p353 = pneg %p46
        %p354 = pneg %p43
        %p355 = scmp.lt.s32.totalorder %s25, 1
        %s356 = scalar_select %p355, %s25, 1
        %s357 = smul.addr %s356, 8
        %s358 = smul.addr %s357, 8
        %s359 = scalar_lea.vmem %s1, %s358
        %p360 = pneg %p72
        %p361 = pneg %p69
        %p362 = pneg %p93
        %p363 = pneg %p90
        %p364 = pneg %p114
        %p365 = pneg %p111
        %p366 = pneg %p135
        %p367 = pneg %p132
        %p368 = pneg %p156
        %p369 = pneg %p153
        %p370 = pneg %p177
        %p371 = pneg %p174
        %p372 = pneg %p198
        %p373 = pneg %p195
        %p374 = pneg %p219
        %p375 = pneg %p216
        %p376 = pneg %p240
        %p377 = pneg %p237
        %p378 = pneg %p266
        %p379 = pneg %p263
        %s380 = sand.u32 %s253, 1
        %s381 = scalar_lea.sflag [#allocation4], %s380
        %s382 = sand.u32 %s253, 1
        %s383 = smul.addr %s382, 64
        %s384 = scalar_lea.vmem [#allocation5], %s383
        %p385 = scmp.lt.s32.totalorder %s25, 1
        %s386 = scalar_select %p385, %s25, 1
        %s387 = smul.addr %s386, 8
        %s388 = smul.addr %s387, 8
        %s389 = scalar_lea.vmem %s0, %s388
        %p390 = scmp.lt.s32.totalorder %s25, 1
        %s391 = scalar_select %p390, %s25, 1
        %s392 = smul.addr %s391, 8
        %s393 = smul.addr %s392, 8
        %s394 = scalar_lea.vmem %s1, %s393
        %v395 = vld [vmem:[%s389] sm:$0xff]
        %v396 = vld [vmem:[%s389 + $0x8] sm:$0xff]
        %v397 = vld [vmem:[%s389 + $0x10] sm:$0xff]
        %v398 = vld [vmem:[%s389 + $0x18] sm:$0xff]
        %v399 = vld [vmem:[%s389 + $0x20] sm:$0xff]
        %v400 = vld [vmem:[%s389 + $0x28] sm:$0xff]
        %v401 = vld [vmem:[%s389 + $0x30] sm:$0xff]
        %v402 = vld [vmem:[%s389 + $0x38] sm:$0xff]
        %v403 = vld [vmem:[%s394] sm:$0xff]
        %v404 = vld [vmem:[%s394 + $0x8] sm:$0xff]
        %v405 = vld [vmem:[%s394 + $0x10] sm:$0xff]
        %v406 = vld [vmem:[%s394 + $0x18] sm:$0xff]
        %v407 = vld [vmem:[%s394 + $0x20] sm:$0xff]
        %v408 = vld [vmem:[%s394 + $0x28] sm:$0xff]
        %v409 = vld [vmem:[%s394 + $0x30] sm:$0xff]
        %v410 = vld [vmem:[%s394 + $0x38] sm:$0xff]
        %v411 = vadd.f32 %v395, %v396
        %412 = vadd.xlane.f32.xlu0 %v411
        %v413 = vpop.xlane.xlu0 %412
        %v414 = vadd.f32 %v397, %v398
        %415 = vadd.xlane.f32.xlu0 %v414
        %v416 = vpop.xlane.xlu0 %415
        %v417 = vadd.f32 %v399, %v400
        %418 = vadd.xlane.f32.xlu0 %v417
        %v419 = vpop.xlane.xlu0 %418
        %v420 = vadd.f32 %v401, %v402
        %421 = vadd.xlane.f32.xlu0 %v420
        %v422 = vpop.xlane.xlu0 %421
        %v423 = vrcp.pop 256.0
        %v424 = vmul.f32 256.0, %v423
        %v425 = vsub.f32 1.0, %v424
        %v426 = vmul.f32 %v423, %v425
        %v427 = vadd.f32 %v423, %v426
        %vm428 = vweird.f32 %v423
        %v429 = vsel %vm428, %v423, %v427
        %v430 = vmul.f32 %v413, %v429
        %v431 = vmul.f32 %v416, %v429
        %v432 = vmul.f32 %v419, %v429
        %v433 = vmul.f32 %v422, %v429
        %v434 = vld [vmem:[%s2] sm:$0xff]
        %v435 = vld [vmem:[%s2 + $0x8] sm:$0xff]
        %v436 = vld [vmem:[%s2 + $0x10] sm:$0xff]
        %v437 = vld [vmem:[%s2 + $0x18] sm:$0xff]
        %vm438 = vcmask 261120
        %v440 = vsel %vm438, %v434, 0
        %v443 = vsel %vm438, %v435, 0
        %v446 = vsel %vm438, %v436, 0
        %v449 = vsel %vm438, %v437, 0
        %451 = vmatpush.msra.mxu0 0.0
        %452 = vmatpush.msra.mxu0 0.0
        %453 = vmatpush.msra.mxu0 0.0
        %454 = vmatpush.msra.mxu0 0.0
        %455 = vmatpush.msra.mxu0 0.0
        %456 = vmatpush.msra.mxu0 0.0
        %457 = vmatpush.msra.mxu0 0.0
        %458 = vmatpush.msra.mxu0 0.0
        %459 = vmatpush.msra.mxu0 0.0
        %460 = vmatpush.msra.mxu0 0.0
        %461 = vmatpush.msra.mxu0 0.0
        %462 = vmatpush.msra.mxu0 0.0
        %463 = vmatpush.msra.mxu0 %v433
        %464 = vmatpush.msra.mxu0 %v432
        %465 = vmatpush.msra.mxu0 %v431
        %466 = vmatpush.msra.mxu0 %v430
        %467 = vmatmul.f32.gmra.mxu0 %v440
        %v468 = vpop.f32.mrf.mxu0
        %v469 = vadd.f32 0.0, %v468
        %470 = vmatmul.f32.gmra.mxu0 %v443
        %v471 = vpop.f32.mrf.mxu0
        %v472 = vadd.f32 0.0, %v471
        %473 = vmatmul.f32.gmra.mxu0 %v446
        %v474 = vpop.f32.mrf.mxu0
        %v475 = vadd.f32 0.0, %v474
        %476 = vmatmul.f32.gmra.mxu0 %v449
        %v477 = vpop.f32.mrf.mxu0
        %v478 = vadd.f32 0.0, %v477
        %479 = vdwg.mxu0
        %v480 = vxor.u32 %v469, 2147483648
        %v481 = vxor.u32 %v472, 2147483648
        %v482 = vxor.u32 %v475, 2147483648
        %v483 = vxor.u32 %v478, 2147483648
        %v484 = vmul.f32 %v480, 1.442695
        %v485 = vpow.pop %v484
        %v486 = vmul.f32 %v481, 1.442695
        %v487 = vpow.pop %v486
        %v488 = vmul.f32 %v482, 1.442695
        %v489 = vpow.pop %v488
        %v490 = vmul.f32 %v483, 1.442695
        %v491 = vpow.pop %v490
        %v492 = vadd.f32 %v485, 1.0
        %v493 = vadd.f32 %v487, 1.0
        %v494 = vadd.f32 %v489, 1.0
        %v495 = vadd.f32 %v491, 1.0
        %v496 = vrcp.pop %v492
        %v497 = vmul.f32 %v492, %v496
        %v498 = vsub.f32 1.0, %v497
        %v499 = vmul.f32 %v496, %v498
        %v500 = vadd.f32 %v496, %v499
        %vm501 = vweird.f32 %v492
        %vm502 = vweird.f32 %v496
        %vm503 = vmor %vm501, %vm502
        %v504 = vsel %vm503, %v496, %v500
        %v505 = vand.u32 2147483647, %v492
        %vm506 = vcmp.eq.f32.partialorder %v505, 8.507059e+37
        %v507 = vand.u32 %v492, 2147483648
        %v508 = vor.u32 1.1754944e-38, %v507
        %v509 = vsel %vm506, %v508, %v504
        %v510 = vmul.f32 1.0, %v509
        %v511 = vrcp.pop %v493
        %v512 = vmul.f32 %v493, %v511
        %v513 = vsub.f32 1.0, %v512
        %v514 = vmul.f32 %v511, %v513
        %v515 = vadd.f32 %v511, %v514
        %vm516 = vweird.f32 %v493
        %vm517 = vweird.f32 %v511
        %vm518 = vmor %vm516, %vm517
        %v519 = vsel %vm518, %v511, %v515
        %v520 = vand.u32 2147483647, %v493
        %vm521 = vcmp.eq.f32.partialorder %v520, 8.507059e+37
        %v522 = vand.u32 %v493, 2147483648
        %v523 = vor.u32 1.1754944e-38, %v522
        %v524 = vsel %vm521, %v523, %v519
        %v525 = vmul.f32 1.0, %v524
        %v526 = vrcp.pop %v494
        %v527 = vmul.f32 %v494, %v526
        %v528 = vsub.f32 1.0, %v527
        %v529 = vmul.f32 %v526, %v528
        %v530 = vadd.f32 %v526, %v529
        %vm531 = vweird.f32 %v494
        %vm532 = vweird.f32 %v526
        %vm533 = vmor %vm531, %vm532
        %v534 = vsel %vm533, %v526, %v530
        %v535 = vand.u32 2147483647, %v494
        %vm536 = vcmp.eq.f32.partialorder %v535, 8.507059e+37
        %v537 = vand.u32 %v494, 2147483648
        %v538 = vor.u32 1.1754944e-38, %v537
        %v539 = vsel %vm536, %v538, %v534
        %v540 = vmul.f32 1.0, %v539
        %v541 = vrcp.pop %v495
        %v542 = vmul.f32 %v495, %v541
        %v543 = vsub.f32 1.0, %v542
        %v544 = vmul.f32 %v541, %v543
        %v545 = vadd.f32 %v541, %v544
        %vm546 = vweird.f32 %v495
        %vm547 = vweird.f32 %v541
        %vm548 = vmor %vm546, %vm547
        %v549 = vsel %vm548, %v541, %v545
        %v550 = vand.u32 2147483647, %v495
        %vm551 = vcmp.eq.f32.partialorder %v550, 8.507059e+37
        %v552 = vand.u32 %v495, 2147483648
        %v553 = vor.u32 1.1754944e-38, %v552
        %v554 = vsel %vm551, %v553, %v549
        %v555 = vmul.f32 1.0, %v554
        %557 = vset.pattern.permute.xlu0 0
        %558 = vperm.xlu0 %557, %v510
        %v559 = vpop.permute.xlu0 %558
        %562 = vset.pattern.permute.xlu0 0
        %563 = vperm.xlu0 %562, %v525
        %v564 = vpop.permute.xlu0 %563
        %567 = vset.pattern.permute.xlu0 0
        %568 = vperm.xlu0 %567, %v540
        %v569 = vpop.permute.xlu0 %568
        %572 = vset.pattern.permute.xlu0 0
        %573 = vperm.xlu0 %572, %v555
        %v574 = vpop.permute.xlu0 %573
        %v576 = vmul.f32 %v395, %v559
        %v577 = vmul.f32 %v396, %v559
        %v578 = vmul.f32 %v397, %v564
        %v579 = vmul.f32 %v398, %v564
        %v580 = vmul.f32 %v399, %v569
        %v581 = vmul.f32 %v400, %v569
        %v582 = vmul.f32 %v401, %v574
        %v583 = vmul.f32 %v402, %v574
        %v584 = vadd.f32 %v576, %v403
        %v585 = vadd.f32 %v577, %v404
        %v586 = vadd.f32 %v578, %v405
        %v587 = vadd.f32 %v579, %v406
        %v588 = vadd.f32 %v580, %v407
        %v589 = vadd.f32 %v581, %v408
        %v590 = vadd.f32 %v582, %v409
        %v591 = vadd.f32 %v583, %v410
        %v592 = vld [vmem:[%s6] sm:$0x3]
        %v594 = vsel %vm438, %v592, 0
        %596 = vmatpush.msra.mxu0 0.0
        %597 = vmatpush.msra.mxu0 0.0
        %598 = vmatpush.msra.mxu0 0.0
        %599 = vmatpush.msra.mxu0 0.0
        %600 = vmatpush.msra.mxu0 0.0
        %601 = vmatpush.msra.mxu0 0.0
        %602 = vmatpush.msra.mxu0 0.0
        %603 = vmatpush.msra.mxu0 0.0
        %604 = vmatpush.msra.mxu0 0.0
        %605 = vmatpush.msra.mxu0 0.0
        %606 = vmatpush.msra.mxu0 0.0
        %607 = vmatpush.msra.mxu0 0.0
        %608 = vmatpush.msra.mxu0 %v590
        %609 = vmatpush.msra.mxu0 %v588
        %610 = vmatpush.msra.mxu0 %v586
        %611 = vmatpush.msra.mxu0 %v584
        %612 = vmatmul.f32.gmra.mxu0 %v594
        %v613 = vpop.f32.mrf.mxu0
        %v614 = vadd.f32 0.0, %v613
        %615 = vdwg.mxu0
        %616 = vmatpush.msra.mxu0 0.0
        %617 = vmatpush.msra.mxu0 0.0
        %618 = vmatpush.msra.mxu0 0.0
        %619 = vmatpush.msra.mxu0 0.0
        %620 = vmatpush.msra.mxu0 0.0
        %621 = vmatpush.msra.mxu0 0.0
        %622 = vmatpush.msra.mxu0 0.0
        %623 = vmatpush.msra.mxu0 0.0
        %624 = vmatpush.msra.mxu0 0.0
        %625 = vmatpush.msra.mxu0 0.0
        %626 = vmatpush.msra.mxu0 0.0
        %627 = vmatpush.msra.mxu0 0.0
        %628 = vmatpush.msra.mxu0 %v591
        %629 = vmatpush.msra.mxu0 %v589
        %630 = vmatpush.msra.mxu0 %v587
        %631 = vmatpush.msra.mxu0 %v585
        %632 = vmatmul.f32.gmra.mxu0 %v594
        %v633 = vpop.f32.mrf.mxu0
        %v634 = vadd.f32 0.0, %v633
        %635 = vdwg.mxu0
        %v636 = vld [vmem:[%s3] sm:$0xff]
        %v637 = vld [vmem:[%s3 + $0x8] sm:$0xff]
        %v638 = vld [vmem:[%s3 + $0x10] sm:$0xff]
        %v639 = vld [vmem:[%s3 + $0x18] sm:$0xff]
        %v640 = vld [vmem:[%s3 + $0x20] sm:$0xff]
        %v641 = vld [vmem:[%s3 + $0x28] sm:$0xff]
        %v642 = vld [vmem:[%s3 + $0x30] sm:$0xff]
        %v643 = vld [vmem:[%s3 + $0x38] sm:$0xff]
        %v644 = vld [vmem:[%s3 + $0x40] sm:$0xff]
        %v645 = vld [vmem:[%s3 + $0x48] sm:$0xff]
        %v646 = vld [vmem:[%s3 + $0x50] sm:$0xff]
        %v647 = vld [vmem:[%s3 + $0x58] sm:$0xff]
        %v648 = vld [vmem:[%s3 + $0x60] sm:$0xff]
        %v649 = vld [vmem:[%s3 + $0x68] sm:$0xff]
        %v650 = vld [vmem:[%s3 + $0x70] sm:$0xff]
        %v651 = vld [vmem:[%s3 + $0x78] sm:$0xff]
        %v652 = vld [vmem:[%s3 + $0x80] sm:$0xff]
        %v653 = vld [vmem:[%s3 + $0x88] sm:$0xff]
        %v654 = vld [vmem:[%s3 + $0x90] sm:$0xff]
        %v655 = vld [vmem:[%s3 + $0x98] sm:$0xff]
        %v656 = vld [vmem:[%s3 + $0xa0] sm:$0xff]
        %v657 = vld [vmem:[%s3 + $0xa8] sm:$0xff]
        %v658 = vld [vmem:[%s3 + $0xb0] sm:$0xff]
        %v659 = vld [vmem:[%s3 + $0xb8] sm:$0xff]
        %v660 = vld [vmem:[%s3 + $0xc0] sm:$0xff]
        %v661 = vld [vmem:[%s3 + $0xc8] sm:$0xff]
        %v662 = vld [vmem:[%s3 + $0xd0] sm:$0xff]
        %v663 = vld [vmem:[%s3 + $0xd8] sm:$0xff]
        %v664 = vld [vmem:[%s3 + $0xe0] sm:$0xff]
        %v665 = vld [vmem:[%s3 + $0xe8] sm:$0xff]
        %v666 = vld [vmem:[%s3 + $0xf0] sm:$0xff]
        %v667 = vld [vmem:[%s3 + $0xf8] sm:$0xff]
        %v668 = vld [vmem:[%s7] sm:$0x3]
        %670 = vset.pattern.permute.xlu0 0
        %671 = vperm.xlu0 %670, %v668
        %v672 = vpop.permute.xlu0 %671
        %674 = vmatpush.msra.mxu0 %v651
        %675 = vmatpush.msra.mxu0 %v650
        %676 = vmatpush.msra.mxu0 %v649
        %677 = vmatpush.msra.mxu0 %v648
        %678 = vmatpush.msra.mxu0 %v647
        %679 = vmatpush.msra.mxu0 %v646
        %680 = vmatpush.msra.mxu0 %v645
        %681 = vmatpush.msra.mxu0 %v644
        %682 = vmatpush.msra.mxu0 %v643
        %683 = vmatpush.msra.mxu0 %v642
        %684 = vmatpush.msra.mxu0 %v641
        %685 = vmatpush.msra.mxu0 %v640
        %686 = vmatpush.msra.mxu0 %v639
        %687 = vmatpush.msra.mxu0 %v638
        %688 = vmatpush.msra.mxu0 %v637
        %689 = vmatpush.msra.mxu0 %v636
        %690 = vmatmul.f32.gmra.mxu0 %v614
        %v691 = vpop.f32.mrf.mxu0
        %v692 = vadd.f32 %v672, %v691
        %693 = vdwg.mxu0
        %694 = vmatpush.msra.mxu0 %v667
        %695 = vmatpush.msra.mxu0 %v666
        %696 = vmatpush.msra.mxu0 %v665
        %697 = vmatpush.msra.mxu0 %v664
        %698 = vmatpush.msra.mxu0 %v663
        %699 = vmatpush.msra.mxu0 %v662
        %700 = vmatpush.msra.mxu0 %v661
        %701 = vmatpush.msra.mxu0 %v660
        %702 = vmatpush.msra.mxu0 %v659
        %703 = vmatpush.msra.mxu0 %v658
        %704 = vmatpush.msra.mxu0 %v657
        %705 = vmatpush.msra.mxu0 %v656
        %706 = vmatpush.msra.mxu0 %v655
        %707 = vmatpush.msra.mxu0 %v654
        %708 = vmatpush.msra.mxu0 %v653
        %709 = vmatpush.msra.mxu0 %v652
        %710 = vmatmul.f32.gmra.mxu0 %v634
        %v711 = vpop.f32.mrf.mxu0
        %v712 = vadd.f32 %v692, %v711
        %713 = vdwg.mxu0
        %v714 = vmax.f32 %v712, 0.0
        %v715 = vld [vmem:[%s4] sm:$0xff]
        %v716 = vld [vmem:[%s4 + $0x8] sm:$0xff]
        %v717 = vld [vmem:[%s4 + $0x10] sm:$0xff]
        %v718 = vld [vmem:[%s4 + $0x18] sm:$0xff]
        %vm719 = vcmask 130048
        %v721 = vsel %vm719, %v714, 0
        %723 = vmatpush.msra.mxu0 0.0
        %724 = vmatpush.msra.mxu0 0.0
        %725 = vmatpush.msra.mxu0 0.0
        %726 = vmatpush.msra.mxu0 0.0
        %727 = vmatpush.msra.mxu0 0.0
        %728 = vmatpush.msra.mxu0 0.0
        %729 = vmatpush.msra.mxu0 0.0
        %730 = vmatpush.msra.mxu0 0.0
        %731 = vmatpush.msra.mxu0 0.0
        %732 = vmatpush.msra.mxu0 0.0
        %733 = vmatpush.msra.mxu0 0.0
        %734 = vmatpush.msra.mxu0 0.0
        %735 = vmatpush.msra.mxu0 0.0
        %736 = vmatpush.msra.mxu0 0.0
        %737 = vmatpush.msra.mxu0 %v717
        %738 = vmatpush.msra.mxu0 %v715
        %739 = vmatmul.f32.gmra.mxu0 %v721
        %v740 = vpop.f32.mrf.mxu0
        %v741 = vadd.f32 0.0, %v740
        %742 = vdwg.mxu0
        %743 = vmatpush.msra.mxu0 0.0
        %744 = vmatpush.msra.mxu0 0.0
        %745 = vmatpush.msra.mxu0 0.0
        %746 = vmatpush.msra.mxu0 0.0
        %747 = vmatpush.msra.mxu0 0.0
        %748 = vmatpush.msra.mxu0 0.0
        %749 = vmatpush.msra.mxu0 0.0
        %750 = vmatpush.msra.mxu0 0.0
        %751 = vmatpush.msra.mxu0 0.0
        %752 = vmatpush.msra.mxu0 0.0
        %753 = vmatpush.msra.mxu0 0.0
        %754 = vmatpush.msra.mxu0 0.0
        %755 = vmatpush.msra.mxu0 0.0
        %756 = vmatpush.msra.mxu0 0.0
        %757 = vmatpush.msra.mxu0 %v718
        %758 = vmatpush.msra.mxu0 %v716
        %759 = vmatmul.f32.gmra.mxu0 %v721
        %v760 = vpop.f32.mrf.mxu0
        %v761 = vadd.f32 0.0, %v760
        %762 = vdwg.mxu0
        %v763 = vld [vmem:[#allocation2] sm:$0xff]
        %v764 = vld [vmem:[#allocation2 + $0x8] sm:$0xff]
        %v765 = vld [vmem:[#allocation2 + $0x10] sm:$0xff]
        %v766 = vld [vmem:[#allocation2 + $0x18] sm:$0xff]
        %767 = vrot.lane.b32.xlu0 %v714, 112
        %v768 = vpop.permute.xlu0 %767
        %v769 = vsel %vm719, %v768, 0
        %771 = vmatpush.msra.mxu0 0.0
        %772 = vmatpush.msra.mxu0 0.0
        %773 = vmatpush.msra.mxu0 0.0
        %774 = vmatpush.msra.mxu0 0.0
        %775 = vmatpush.msra.mxu0 0.0
        %776 = vmatpush.msra.mxu0 0.0
        %777 = vmatpush.msra.mxu0 0.0
        %778 = vmatpush.msra.mxu0 0.0
        %779 = vmatpush.msra.mxu0 0.0
        %780 = vmatpush.msra.mxu0 0.0
        %781 = vmatpush.msra.mxu0 0.0
        %782 = vmatpush.msra.mxu0 0.0
        %783 = vmatpush.msra.mxu0 0.0
        %784 = vmatpush.msra.mxu0 0.0
        %785 = vmatpush.msra.mxu0 %v765
        %786 = vmatpush.msra.mxu0 %v763
        %787 = vmatmul.f32.gmra.mxu0 %v769
        %v788 = vpop.f32.mrf.mxu0
        %v789 = vadd.f32 0.0, %v788
        %790 = vdwg.mxu0
        %791 = vmatpush.msra.mxu0 0.0
        %792 = vmatpush.msra.mxu0 0.0
        %793 = vmatpush.msra.mxu0 0.0
        %794 = vmatpush.msra.mxu0 0.0
        %795 = vmatpush.msra.mxu0 0.0
        %796 = vmatpush.msra.mxu0 0.0
        %797 = vmatpush.msra.mxu0 0.0
        %798 = vmatpush.msra.mxu0 0.0
        %799 = vmatpush.msra.mxu0 0.0
        %800 = vmatpush.msra.mxu0 0.0
        %801 = vmatpush.msra.mxu0 0.0
        %802 = vmatpush.msra.mxu0 0.0
        %803 = vmatpush.msra.mxu0 0.0
        %804 = vmatpush.msra.mxu0 0.0
        %805 = vmatpush.msra.mxu0 %v766
        %806 = vmatpush.msra.mxu0 %v764
        %807 = vmatmul.f32.gmra.mxu0 %v769
        %v808 = vpop.f32.mrf.mxu0
        %v809 = vadd.f32 0.0, %v808
        %810 = vdwg.mxu0
        %v811 = vld [vmem:[%s8] sm:$0xff]
        %v812 = vld [vmem:[%s8 + $0x8] sm:$0xff]
        %v813 = vld [vmem:[%s8 + $0x10] sm:$0xff]
        %v814 = vld [vmem:[%s8 + $0x18] sm:$0xff]
        %vm815 = vcmask 15360
        %v817 = vsel %vm815, %v811, 0
        %v820 = vsel %vm815, %v812, 0
        %v823 = vsel %vm815, %v813, 0
        %v826 = vsel %vm815, %v814, 0
        %vm828 = vcmask 1041408
        %v830 = vsel %vm828, %v741, 0
        %v833 = vsel %vm828, %v761, 0
        %835 = vmatpush.msra.mxu0 0.0
        %836 = vmatpush.msra.mxu0 0.0
        %837 = vmatpush.msra.mxu0 0.0
        %838 = vmatpush.msra.mxu0 0.0
        %839 = vmatpush.msra.mxu0 0.0
        %840 = vmatpush.msra.mxu0 0.0
        %841 = vmatpush.msra.mxu0 0.0
        %842 = vmatpush.msra.mxu0 0.0
        %843 = vmatpush.msra.mxu0 0.0
        %844 = vmatpush.msra.mxu0 0.0
        %845 = vmatpush.msra.mxu0 0.0
        %846 = vmatpush.msra.mxu0 0.0
        %847 = vmatpush.msra.mxu0 0.0
        %848 = vmatpush.msra.mxu0 0.0
        %849 = vmatpush.msra.mxu0 0.0
        %850 = vmatpush.msra.mxu0 %v830
        %851 = vmatmul.f32.gmra.mxu0 %v817
        %v852 = vpop.f32.mrf.mxu0
        %v853 = vadd.f32 0.0, %v852
        %854 = vmatmul.f32.gmra.mxu0 %v820
        %v855 = vpop.f32.mrf.mxu0
        %v856 = vadd.f32 0.0, %v855
        %857 = vmatmul.f32.gmra.mxu0 %v823
        %v858 = vpop.f32.mrf.mxu0
        %v859 = vadd.f32 0.0, %v858
        %860 = vmatmul.f32.gmra.mxu0 %v826
        %v861 = vpop.f32.mrf.mxu0
        %v862 = vadd.f32 0.0, %v861
        %863 = vdwg.mxu0
        %864 = vmatpush.msra.mxu0 0.0
        %865 = vmatpush.msra.mxu0 0.0
        %866 = vmatpush.msra.mxu0 0.0
        %867 = vmatpush.msra.mxu0 0.0
        %868 = vmatpush.msra.mxu0 0.0
        %869 = vmatpush.msra.mxu0 0.0
        %870 = vmatpush.msra.mxu0 0.0
        %871 = vmatpush.msra.mxu0 0.0
        %872 = vmatpush.msra.mxu0 0.0
        %873 = vmatpush.msra.mxu0 0.0
        %874 = vmatpush.msra.mxu0 0.0
        %875 = vmatpush.msra.mxu0 0.0
        %876 = vmatpush.msra.mxu0 0.0
        %877 = vmatpush.msra.mxu0 0.0
        %878 = vmatpush.msra.mxu0 0.0
        %879 = vmatpush.msra.mxu0 %v833
        %880 = vmatmul.f32.gmra.mxu0 %v817
        %v881 = vpop.f32.mrf.mxu0
        %v882 = vadd.f32 0.0, %v881
        %883 = vmatmul.f32.gmra.mxu0 %v820
        %v884 = vpop.f32.mrf.mxu0
        %v885 = vadd.f32 0.0, %v884
        %886 = vmatmul.f32.gmra.mxu0 %v823
        %v887 = vpop.f32.mrf.mxu0
        %v888 = vadd.f32 0.0, %v887
        %889 = vmatmul.f32.gmra.mxu0 %v826
        %v890 = vpop.f32.mrf.mxu0
        %v891 = vadd.f32 0.0, %v890
        %892 = vdwg.mxu0
        %v893 = vxor.u32 %v853, 2147483648
        %v894 = vxor.u32 %v882, 2147483648
        %v895 = vxor.u32 %v856, 2147483648
        %v896 = vxor.u32 %v885, 2147483648
        %v897 = vxor.u32 %v859, 2147483648
        %v898 = vxor.u32 %v888, 2147483648
        %v899 = vxor.u32 %v862, 2147483648
        %v900 = vxor.u32 %v891, 2147483648
        %v901 = vmul.f32 %v893, 1.442695
        %v902 = vpow.pop %v901
        %v903 = vmul.f32 %v894, 1.442695
        %v904 = vpow.pop %v903
        %v905 = vmul.f32 %v895, 1.442695
        %v906 = vpow.pop %v905
        %v907 = vmul.f32 %v896, 1.442695
        %v908 = vpow.pop %v907
        %v909 = vmul.f32 %v897, 1.442695
        %v910 = vpow.pop %v909
        %v911 = vmul.f32 %v898, 1.442695
        %v912 = vpow.pop %v911
        %v913 = vmul.f32 %v899, 1.442695
        %v914 = vpow.pop %v913
        %v915 = vmul.f32 %v900, 1.442695
        %v916 = vpow.pop %v915
        %v917 = vadd.f32 %v902, 1.0
        %v918 = vadd.f32 %v904, 1.0
        %v919 = vadd.f32 %v906, 1.0
        %v920 = vadd.f32 %v908, 1.0
        %v921 = vadd.f32 %v910, 1.0
        %v922 = vadd.f32 %v912, 1.0
        %v923 = vadd.f32 %v914, 1.0
        %v924 = vadd.f32 %v916, 1.0
        %v925 = vrcp.pop %v917
        %v926 = vmul.f32 %v917, %v925
        %v927 = vsub.f32 1.0, %v926
        %v928 = vmul.f32 %v925, %v927
        %v929 = vadd.f32 %v925, %v928
        %vm930 = vweird.f32 %v917
        %vm931 = vweird.f32 %v925
        %vm932 = vmor %vm930, %vm931
        %v933 = vsel %vm932, %v925, %v929
        %v934 = vand.u32 2147483647, %v917
        %vm935 = vcmp.eq.f32.partialorder %v934, 8.507059e+37
        %v936 = vand.u32 %v917, 2147483648
        %v937 = vor.u32 1.1754944e-38, %v936
        %v938 = vsel %vm935, %v937, %v933
        %v939 = vmul.f32 1.0, %v938
        %v940 = vrcp.pop %v918
        %v941 = vmul.f32 %v918, %v940
        %v942 = vsub.f32 1.0, %v941
        %v943 = vmul.f32 %v940, %v942
        %v944 = vadd.f32 %v940, %v943
        %vm945 = vweird.f32 %v918
        %vm946 = vweird.f32 %v940
        %vm947 = vmor %vm945, %vm946
        %v948 = vsel %vm947, %v940, %v944
        %v949 = vand.u32 2147483647, %v918
        %vm950 = vcmp.eq.f32.partialorder %v949, 8.507059e+37
        %v951 = vand.u32 %v918, 2147483648
        %v952 = vor.u32 1.1754944e-38, %v951
        %v953 = vsel %vm950, %v952, %v948
        %v954 = vmul.f32 1.0, %v953
        %v955 = vrcp.pop %v919
        %v956 = vmul.f32 %v919, %v955
        %v957 = vsub.f32 1.0, %v956
        %v958 = vmul.f32 %v955, %v957
        %v959 = vadd.f32 %v955, %v958
        %vm960 = vweird.f32 %v919
        %vm961 = vweird.f32 %v955
        %vm962 = vmor %vm960, %vm961
        %v963 = vsel %vm962, %v955, %v959
        %v964 = vand.u32 2147483647, %v919
        %vm965 = vcmp.eq.f32.partialorder %v964, 8.507059e+37
        %v966 = vand.u32 %v919, 2147483648
        %v967 = vor.u32 1.1754944e-38, %v966
        %v968 = vsel %vm965, %v967, %v963
        %v969 = vmul.f32 1.0, %v968
        %v970 = vrcp.pop %v920
        %v971 = vmul.f32 %v920, %v970
        %v972 = vsub.f32 1.0, %v971
        %v973 = vmul.f32 %v970, %v972
        %v974 = vadd.f32 %v970, %v973
        %vm975 = vweird.f32 %v920
        %vm976 = vweird.f32 %v970
        %vm977 = vmor %vm975, %vm976
        %v978 = vsel %vm977, %v970, %v974
        %v979 = vand.u32 2147483647, %v920
        %vm980 = vcmp.eq.f32.partialorder %v979, 8.507059e+37
        %v981 = vand.u32 %v920, 2147483648
        %v982 = vor.u32 1.1754944e-38, %v981
        %v983 = vsel %vm980, %v982, %v978
        %v984 = vmul.f32 1.0, %v983
        %v985 = vrcp.pop %v921
        %v986 = vmul.f32 %v921, %v985
        %v987 = vsub.f32 1.0, %v986
        %v988 = vmul.f32 %v985, %v987
        %v989 = vadd.f32 %v985, %v988
        %vm990 = vweird.f32 %v921
        %vm991 = vweird.f32 %v985
        %vm992 = vmor %vm990, %vm991
        %v993 = vsel %vm992, %v985, %v989
        %v994 = vand.u32 2147483647, %v921
        %vm995 = vcmp.eq.f32.partialorder %v994, 8.507059e+37
        %v996 = vand.u32 %v921, 2147483648
        %v997 = vor.u32 1.1754944e-38, %v996
        %v998 = vsel %vm995, %v997, %v993
        %v999 = vmul.f32 1.0, %v998
        %v1000 = vrcp.pop %v922
        %v1001 = vmul.f32 %v922, %v1000
        %v1002 = vsub.f32 1.0, %v1001
        %v1003 = vmul.f32 %v1000, %v1002
        %v1004 = vadd.f32 %v1000, %v1003
        %vm1005 = vweird.f32 %v922
        %vm1006 = vweird.f32 %v1000
        %vm1007 = vmor %vm1005, %vm1006
        %v1008 = vsel %vm1007, %v1000, %v1004
        %v1009 = vand.u32 2147483647, %v922
        %vm1010 = vcmp.eq.f32.partialorder %v1009, 8.507059e+37
        %v1011 = vand.u32 %v922, 2147483648
        %v1012 = vor.u32 1.1754944e-38, %v1011
        %v1013 = vsel %vm1010, %v1012, %v1008
        %v1014 = vmul.f32 1.0, %v1013
        %v1015 = vrcp.pop %v923
        %v1016 = vmul.f32 %v923, %v1015
        %v1017 = vsub.f32 1.0, %v1016
        %v1018 = vmul.f32 %v1015, %v1017
        %v1019 = vadd.f32 %v1015, %v1018
        %vm1020 = vweird.f32 %v923
        %vm1021 = vweird.f32 %v1015
        %vm1022 = vmor %vm1020, %vm1021
        %v1023 = vsel %vm1022, %v1015, %v1019
        %v1024 = vand.u32 2147483647, %v923
        %vm1025 = vcmp.eq.f32.partialorder %v1024, 8.507059e+37
        %v1026 = vand.u32 %v923, 2147483648
        %v1027 = vor.u32 1.1754944e-38, %v1026
        %v1028 = vsel %vm1025, %v1027, %v1023
        %v1029 = vmul.f32 1.0, %v1028
        %v1030 = vrcp.pop %v924
        %v1031 = vmul.f32 %v924, %v1030
        %v1032 = vsub.f32 1.0, %v1031
        %v1033 = vmul.f32 %v1030, %v1032
        %v1034 = vadd.f32 %v1030, %v1033
        %vm1035 = vweird.f32 %v924
        %vm1036 = vweird.f32 %v1030
        %vm1037 = vmor %vm1035, %vm1036
        %v1038 = vsel %vm1037, %v1030, %v1034
        %v1039 = vand.u32 2147483647, %v924
        %vm1040 = vcmp.eq.f32.partialorder %v1039, 8.507059e+37
        %v1041 = vand.u32 %v924, 2147483648
        %v1042 = vor.u32 1.1754944e-38, %v1041
        %v1043 = vsel %vm1040, %v1042, %v1038
        %v1044 = vmul.f32 1.0, %v1043
        %v1045 = vld [vmem:[%s9] sm:$0xff]
        %v1046 = vld [vmem:[%s9 + $0x8] sm:$0xff]
        %v1047 = vld [vmem:[%s9 + $0x10] sm:$0xff]
        %v1048 = vld [vmem:[%s9 + $0x18] sm:$0xff]
        %v1050 = vsel %vm815, %v1045, 0
        %v1053 = vsel %vm815, %v1046, 0
        %v1056 = vsel %vm815, %v1047, 0
        %v1059 = vsel %vm815, %v1048, 0
        %v1062 = vsel %vm828, %v789, 0
        %v1065 = vsel %vm828, %v809, 0
        %1067 = vmatpush.msra.mxu0 0.0
        %1068 = vmatpush.msra.mxu0 0.0
        %1069 = vmatpush.msra.mxu0 0.0
        %1070 = vmatpush.msra.mxu0 0.0
        %1071 = vmatpush.msra.mxu0 0.0
        %1072 = vmatpush.msra.mxu0 0.0
        %1073 = vmatpush.msra.mxu0 0.0
        %1074 = vmatpush.msra.mxu0 0.0
        %1075 = vmatpush.msra.mxu0 0.0
        %1076 = vmatpush.msra.mxu0 0.0
        %1077 = vmatpush.msra.mxu0 0.0
        %1078 = vmatpush.msra.mxu0 0.0
        %1079 = vmatpush.msra.mxu0 0.0
        %1080 = vmatpush.msra.mxu0 0.0
        %1081 = vmatpush.msra.mxu0 0.0
        %1082 = vmatpush.msra.mxu0 %v1062
        %1083 = vmatmul.f32.gmra.mxu0 %v1050
        %v1084 = vpop.f32.mrf.mxu0
        %v1085 = vadd.f32 0.0, %v1084
        %1086 = vmatmul.f32.gmra.mxu0 %v1053
        %v1087 = vpop.f32.mrf.mxu0
        %v1088 = vadd.f32 0.0, %v1087
        %1089 = vmatmul.f32.gmra.mxu0 %v1056
        %v1090 = vpop.f32.mrf.mxu0
        %v1091 = vadd.f32 0.0, %v1090
        %1092 = vmatmul.f32.gmra.mxu0 %v1059
        %v1093 = vpop.f32.mrf.mxu0
        %v1094 = vadd.f32 0.0, %v1093
        %1095 = vdwg.mxu0
        %1096 = vmatpush.msra.mxu0 0.0
        %1097 = vmatpush.msra.mxu0 0.0
        %1098 = vmatpush.msra.mxu0 0.0
        %1099 = vmatpush.msra.mxu0 0.0
        %1100 = vmatpush.msra.mxu0 0.0
        %1101 = vmatpush.msra.mxu0 0.0
        %1102 = vmatpush.msra.mxu0 0.0
        %1103 = vmatpush.msra.mxu0 0.0
        %1104 = vmatpush.msra.mxu0 0.0
        %1105 = vmatpush.msra.mxu0 0.0
        %1106 = vmatpush.msra.mxu0 0.0
        %1107 = vmatpush.msra.mxu0 0.0
        %1108 = vmatpush.msra.mxu0 0.0
        %1109 = vmatpush.msra.mxu0 0.0
        %1110 = vmatpush.msra.mxu0 0.0
        %1111 = vmatpush.msra.mxu0 %v1065
        %1112 = vmatmul.f32.gmra.mxu0 %v1050
        %v1113 = vpop.f32.mrf.mxu0
        %v1114 = vadd.f32 0.0, %v1113
        %1115 = vmatmul.f32.gmra.mxu0 %v1053
        %v1116 = vpop.f32.mrf.mxu0
        %v1117 = vadd.f32 0.0, %v1116
        %1118 = vmatmul.f32.gmra.mxu0 %v1056
        %v1119 = vpop.f32.mrf.mxu0
        %v1120 = vadd.f32 0.0, %v1119
        %1121 = vmatmul.f32.gmra.mxu0 %v1059
        %v1122 = vpop.f32.mrf.mxu0
        %v1123 = vadd.f32 0.0, %v1122
        %1124 = vdwg.mxu0
        %v1125 = vxor.u32 %v1085, 2147483648
        %v1126 = vxor.u32 %v1114, 2147483648
        %v1127 = vxor.u32 %v1088, 2147483648
        %v1128 = vxor.u32 %v1117, 2147483648
        %v1129 = vxor.u32 %v1091, 2147483648
        %v1130 = vxor.u32 %v1120, 2147483648
        %v1131 = vxor.u32 %v1094, 2147483648
        %v1132 = vxor.u32 %v1123, 2147483648
        %v1133 = vmul.f32 %v1125, 1.442695
        %v1134 = vpow.pop %v1133
        %v1135 = vmul.f32 %v1126, 1.442695
        %v1136 = vpow.pop %v1135
        %v1137 = vmul.f32 %v1127, 1.442695
        %v1138 = vpow.pop %v1137
        %v1139 = vmul.f32 %v1128, 1.442695
        %v1140 = vpow.pop %v1139
        %v1141 = vmul.f32 %v1129, 1.442695
        %v1142 = vpow.pop %v1141
        %v1143 = vmul.f32 %v1130, 1.442695
        %v1144 = vpow.pop %v1143
        %v1145 = vmul.f32 %v1131, 1.442695
        %v1146 = vpow.pop %v1145
        %v1147 = vmul.f32 %v1132, 1.442695
        %v1148 = vpow.pop %v1147
        %v1149 = vadd.f32 %v1134, 1.0
        %v1150 = vadd.f32 %v1136, 1.0
        %v1151 = vadd.f32 %v1138, 1.0
        %v1152 = vadd.f32 %v1140, 1.0
        %v1153 = vadd.f32 %v1142, 1.0
        %v1154 = vadd.f32 %v1144, 1.0
        %v1155 = vadd.f32 %v1146, 1.0
        %v1156 = vadd.f32 %v1148, 1.0
        %v1157 = vrcp.pop %v1149
        %v1158 = vmul.f32 %v1149, %v1157
        %v1159 = vsub.f32 1.0, %v1158
        %v1160 = vmul.f32 %v1157, %v1159
        %v1161 = vadd.f32 %v1157, %v1160
        %vm1162 = vweird.f32 %v1149
        %vm1163 = vweird.f32 %v1157
        %vm1164 = vmor %vm1162, %vm1163
        %v1165 = vsel %vm1164, %v1157, %v1161
        %v1166 = vand.u32 2147483647, %v1149
        %vm1167 = vcmp.eq.f32.partialorder %v1166, 8.507059e+37
        %v1168 = vand.u32 %v1149, 2147483648
        %v1169 = vor.u32 1.1754944e-38, %v1168
        %v1170 = vsel %vm1167, %v1169, %v1165
        %v1171 = vmul.f32 1.0, %v1170
        %v1172 = vrcp.pop %v1150
        %v1173 = vmul.f32 %v1150, %v1172
        %v1174 = vsub.f32 1.0, %v1173
        %v1175 = vmul.f32 %v1172, %v1174
        %v1176 = vadd.f32 %v1172, %v1175
        %vm1177 = vweird.f32 %v1150
        %vm1178 = vweird.f32 %v1172
        %vm1179 = vmor %vm1177, %vm1178
        %v1180 = vsel %vm1179, %v1172, %v1176
        %v1181 = vand.u32 2147483647, %v1150
        %vm1182 = vcmp.eq.f32.partialorder %v1181, 8.507059e+37
        %v1183 = vand.u32 %v1150, 2147483648
        %v1184 = vor.u32 1.1754944e-38, %v1183
        %v1185 = vsel %vm1182, %v1184, %v1180
        %v1186 = vmul.f32 1.0, %v1185
        %v1187 = vrcp.pop %v1151
        %v1188 = vmul.f32 %v1151, %v1187
        %v1189 = vsub.f32 1.0, %v1188
        %v1190 = vmul.f32 %v1187, %v1189
        %v1191 = vadd.f32 %v1187, %v1190
        %vm1192 = vweird.f32 %v1151
        %vm1193 = vweird.f32 %v1187
        %vm1194 = vmor %vm1192, %vm1193
        %v1195 = vsel %vm1194, %v1187, %v1191
        %v1196 = vand.u32 2147483647, %v1151
        %vm1197 = vcmp.eq.f32.partialorder %v1196, 8.507059e+37
        %v1198 = vand.u32 %v1151, 2147483648
        %v1199 = vor.u32 1.1754944e-38, %v1198
        %v1200 = vsel %vm1197, %v1199, %v1195
        %v1201 = vmul.f32 1.0, %v1200
        %v1202 = vrcp.pop %v1152
        %v1203 = vmul.f32 %v1152, %v1202
        %v1204 = vsub.f32 1.0, %v1203
        %v1205 = vmul.f32 %v1202, %v1204
        %v1206 = vadd.f32 %v1202, %v1205
        %vm1207 = vweird.f32 %v1152
        %vm1208 = vweird.f32 %v1202
        %vm1209 = vmor %vm1207, %vm1208
        %v1210 = vsel %vm1209, %v1202, %v1206
        %v1211 = vand.u32 2147483647, %v1152
        %vm1212 = vcmp.eq.f32.partialorder %v1211, 8.507059e+37
        %v1213 = vand.u32 %v1152, 2147483648
        %v1214 = vor.u32 1.1754944e-38, %v1213
        %v1215 = vsel %vm1212, %v1214, %v1210
        %v1216 = vmul.f32 1.0, %v1215
        %v1217 = vrcp.pop %v1153
        %v1218 = vmul.f32 %v1153, %v1217
        %v1219 = vsub.f32 1.0, %v1218
        %v1220 = vmul.f32 %v1217, %v1219
        %v1221 = vadd.f32 %v1217, %v1220
        %vm1222 = vweird.f32 %v1153
        %vm1223 = vweird.f32 %v1217
        %vm1224 = vmor %vm1222, %vm1223
        %v1225 = vsel %vm1224, %v1217, %v1221
        %v1226 = vand.u32 2147483647, %v1153
        %vm1227 = vcmp.eq.f32.partialorder %v1226, 8.507059e+37
        %v1228 = vand.u32 %v1153, 2147483648
        %v1229 = vor.u32 1.1754944e-38, %v1228
        %v1230 = vsel %vm1227, %v1229, %v1225
        %v1231 = vmul.f32 1.0, %v1230
        %v1232 = vrcp.pop %v1154
        %v1233 = vmul.f32 %v1154, %v1232
        %v1234 = vsub.f32 1.0, %v1233
        %v1235 = vmul.f32 %v1232, %v1234
        %v1236 = vadd.f32 %v1232, %v1235
        %vm1237 = vweird.f32 %v1154
        %vm1238 = vweird.f32 %v1232
        %vm1239 = vmor %vm1237, %vm1238
        %v1240 = vsel %vm1239, %v1232, %v1236
        %v1241 = vand.u32 2147483647, %v1154
        %vm1242 = vcmp.eq.f32.partialorder %v1241, 8.507059e+37
        %v1243 = vand.u32 %v1154, 2147483648
        %v1244 = vor.u32 1.1754944e-38, %v1243
        %v1245 = vsel %vm1242, %v1244, %v1240
        %v1246 = vmul.f32 1.0, %v1245
        %v1247 = vrcp.pop %v1155
        %v1248 = vmul.f32 %v1155, %v1247
        %v1249 = vsub.f32 1.0, %v1248
        %v1250 = vmul.f32 %v1247, %v1249
        %v1251 = vadd.f32 %v1247, %v1250
        %vm1252 = vweird.f32 %v1155
        %vm1253 = vweird.f32 %v1247
        %vm1254 = vmor %vm1252, %vm1253
        %v1255 = vsel %vm1254, %v1247, %v1251
        %v1256 = vand.u32 2147483647, %v1155
        %vm1257 = vcmp.eq.f32.partialorder %v1256, 8.507059e+37
        %v1258 = vand.u32 %v1155, 2147483648
        %v1259 = vor.u32 1.1754944e-38, %v1258
        %v1260 = vsel %vm1257, %v1259, %v1255
        %v1261 = vmul.f32 1.0, %v1260
        %v1262 = vrcp.pop %v1156
        %v1263 = vmul.f32 %v1156, %v1262
        %v1264 = vsub.f32 1.0, %v1263
        %v1265 = vmul.f32 %v1262, %v1264
        %v1266 = vadd.f32 %v1262, %v1265
        %vm1267 = vweird.f32 %v1156
        %vm1268 = vweird.f32 %v1262
        %vm1269 = vmor %vm1267, %vm1268
        %v1270 = vsel %vm1269, %v1262, %v1266
        %v1271 = vand.u32 2147483647, %v1156
        %vm1272 = vcmp.eq.f32.partialorder %v1271, 8.507059e+37
        %v1273 = vand.u32 %v1156, 2147483648
        %v1274 = vor.u32 1.1754944e-38, %v1273
        %v1275 = vsel %vm1272, %v1274, %v1270
        %v1276 = vmul.f32 1.0, %v1275
        %v1277 = vmul.f32 %v584, %v939
        %v1278 = vmul.f32 %v585, %v954
        %v1279 = vmul.f32 %v586, %v969
        %v1280 = vmul.f32 %v587, %v984
        %v1281 = vmul.f32 %v588, %v999
        %v1282 = vmul.f32 %v589, %v1014
        %v1283 = vmul.f32 %v590, %v1029
        %v1284 = vmul.f32 %v591, %v1044
        %v1285 = vmul.f32 %v1277, %v1171
        %v1286 = vmul.f32 %v1278, %v1186
        %v1287 = vmul.f32 %v1279, %v1201
        %v1288 = vmul.f32 %v1280, %v1216
        %v1289 = vmul.f32 %v1281, %v1231
        %v1290 = vmul.f32 %v1282, %v1246
        %v1291 = vmul.f32 %v1283, %v1261
        %v1292 = vmul.f32 %v1284, %v1276
        %1293 = vst [vmem:[%s384] sm:$0xff] %v1285
        %1294 = vst [vmem:[%s384 + $0x8] sm:$0xff] %v1286
        %1295 = vst [vmem:[%s384 + $0x10] sm:$0xff] %v1287
        %1296 = vst [vmem:[%s384 + $0x18] sm:$0xff] %v1288
        %1297 = vst [vmem:[%s384 + $0x20] sm:$0xff] %v1289
        %1298 = vst [vmem:[%s384 + $0x28] sm:$0xff] %v1290
        %1299 = vst [vmem:[%s384 + $0x30] sm:$0xff] %v1291
        %1300 = vst [vmem:[%s384 + $0x38] sm:$0xff] %v1292
        %s1301 = sand.u32 %s253, 1
        %s1302 = scalar_lea.sflag [#allocation4], %s1301
        %s1303 = sand.u32 %s253, 1
        %s1304 = smul.addr %s1303, 64
        %s1305 = scalar_lea.vmem [#allocation5], %s1304
        // Predicated region
        $region65: #{tpu_custom_call.1} parent=59 // pred_check
          %p1306 = pneg %p263
        $region66: #{tpu_custom_call.1} parent=59 // pred_check_branch
          %1308 = sbr.rel (%p1306) target = $region68
        $region67: #{tpu_custom_call.1} parent=59 // pred_region
          %1310 = vsyncadd %s1302, 0
          %s1311 = smul.addr %s25, 8
          %s1312 = smul.addr %s1311, 8
          %s1313 = scalar_lea.hbm %s10, %s1312
          %s1314 = sshll.u32 %s1305, 4
          %s1315 = int_to_ptr.vmem [resolvable:$true] %s1314
          %s1316 = sshll.u32 %s1313, 4
          %s1317 = int_to_ptr.hbm [resolvable:$true] %s1316
          %1322 = dma.vmem_to_hbm [thread:$0]  %s1315, 1024, %s1317, %s1302, 256, 256, 16
        $region68: #{tpu_custom_call.1} parent=59 // pred_fallthru
          _
      $region60: #{tpu_custom_call.1} parent=5 // pred_fallthru
        _
      %p1323 = scmp.le.s32.totalorder 2, %s20
      // Predicated region
      $region69: #{tpu_custom_call.1} parent=5 // pred_check
        %p1324 = pneg %p1323
      $region70: #{tpu_custom_call.1} parent=5 // pred_check_branch
        %1326 = sbr.rel (%p1324) target = $region72
      $region71: #{tpu_custom_call.1} parent=5 // pred_region
        %s1327 = ssub.s32 %s20, 2
        // Predicated region
        $region73: #{tpu_custom_call.1} parent=71 // pred_check
          %p1328 = pneg %p269
        $region74: #{tpu_custom_call.1} parent=71 // pred_check_branch
          %1330 = sbr.rel (%p1328) target = $region76
        $region75: #{tpu_custom_call.1} parent=71 // pred_region
          %s1331 = sand.u32 %s254, 1
          %s1332 = scalar_lea.sflag [#allocation4], %s1331
          %s1333 = sand.u32 %s254, 1
          %s1334 = smul.addr %s1333, 64
          %s1335 = scalar_lea.vmem [#allocation5], %s1334
          %1337 = dma.done %s1332, 1024
        $region76: #{tpu_custom_call.1} parent=71 // pred_fallthru
          _
      $region72: #{tpu_custom_call.1} parent=5 // pred_fallthru
        _
    $region6: #{tpu_custom_call.1} parent=1 // loop_footer
      %s24 = sadd.s32 1, %s20
    $region7: #{tpu_custom_call.1} parent=1 // loop_footer_branch
      %19 = sbr.rel target = $region3
    $region8: #{tpu_custom_call.1} parent=1 // loop_exit
      _
    %1338 = vsyncpa [#allocation3], 1
    %s1339 = scalar_lea.sflag [#allocation3], 1
    %1340 = vsyncpa %s1339, 1
    %1341 = vsyncpa [#allocation4], 1
    %s1342 = scalar_lea.sflag [#allocation4], 1
    %1343 = vsyncpa %s1342, 1

</llo_original>
